<compile_context>
chip_gen: v7x
topology: tpu7x:2x2x1
jax: 0.10.0
libtpu: 0.0.40
codegen_flags: <defaults>
</compile_context>

<pallas_src>
import jax
import jax.numpy as jnp
from jax import lax
from jax.experimental import pallas as pl
from jax.experimental.pallas import tpu as pltpu


def basic_block_kernel(x_ref, w1_ref, w2_ref, b1_ref, b2_ref, bsc_ref, mask_ref,
                       out_ref, sc_ref):
    """B images per grid step, stacked as a row-padded, lane-dense slab."""
    Mp, _ = x_ref.shape          # B*(H+2) slab rows (1 zero pad row above/below each image)
    Mo = Mp - 2                  # conv output rows (centre slab rows 1..Mp-2)
    WCout = out_ref.shape[1]
    f32, bf16 = jnp.float32, jnp.bfloat16

    # ---- conv1 (+ fused 1x1 shortcut): single (Mo, 3*WCin) @ (3*WCin, 2*WCout) matmul.
    # Row-shifted views are sliced at f32 (32-bit sublane granularity), cast to
    # bf16 and stacked along the lane axis to match the K-stacked weights.
    xf = x_ref[...].astype(f32)
    lhs1 = jnp.concatenate([xf[0:Mo].astype(bf16),          # kernel row dy=0 (row above)
                            xf[1:Mo + 1].astype(bf16),      # dy=1 (centre)
                            xf[2:Mo + 2].astype(bf16)],     # dy=2 (row below)
                           axis=-1)
    y1 = jnp.dot(lhs1, w1_ref[...], preferred_element_type=f32)   # (Mo, 2*WCout)

    # Shortcut branch (BN scale already folded into the weight columns); stash
    # it in VMEM so it is not live across the conv2 matmul.
    sc_ref[0:Mo, :] = y1[:, WCout:] + bsc_ref[...]

    # bn1 bias + ReLU; zero the rows whose centre is an inter-image pad row so
    # conv2's vertical taps never leak across images.
    mid = jnp.maximum(y1[:, :WCout] + b1_ref[...], 0.0) * mask_ref[...]

    # ---- conv2: single (Mo, 3*WCout) @ (3*WCout, WCout) matmul.  The row-padded
    # mid slab is built as an in-register value (no VMEM round trip).
    zrow = jnp.zeros((1, WCout), f32)
    up2 = jnp.concatenate([zrow, mid[0:Mo - 1]], axis=0)     # mid at slab row j
    dn2 = jnp.concatenate([mid[1:Mo], zrow], axis=0)         # mid at slab row j+2
    lhs2 = jnp.concatenate([up2.astype(bf16), mid.astype(bf16), dn2.astype(bf16)],
                           axis=-1)
    y2 = jnp.dot(lhs2, w2_ref[...], preferred_element_type=f32)   # (Mo, WCout)

    # bn2 bias + residual add + ReLU; dense lane-width-128 stores.
    out_ref[0:Mo, :] = jnp.maximum(y2 + b2_ref[...] + sc_ref[0:Mo, :], 0.0
                                   ).astype(out_ref.dtype)
    out_ref[Mo:Mp, :] = jnp.zeros((Mp - Mo, WCout), out_ref.dtype)


def basic_block_forward(x_nchw, kp, batch_tile=8):
    """BasicBlock forward: (N, Cin, H, W) f32 -> (N, planes, H, W) f32."""
    N, Cin, H, W = x_nchw.shape
    Cmid = kp["cmid"]
    WCin, WCout = W * Cin, W * Cmid

    # Static layout assumptions of this kernel (stride=1 BasicBlock, lane-dense
    # activations).  Other BasicBlock configs need a different tiling.
    assert WCout == 128, "kernel assumes W * planes == 128 (lane-dense output)"
    assert WCin <= 128, "kernel assumes W * in_planes fits one vreg lane width"

    # Images per grid step: M per matmul ~= B*(H+2).  batch_tile=8 -> M ~= 144
    # (fills v5e's 128-deep MXU); raise to 16 on v6e/v7x when N allows.
    B = max(1, min(batch_tile, N))
    while N % B:
        B -= 1
    if N // B < 2 and B > 1:              # keep >= 2 grid steps for the 2 v7x TCs
        B = max(1, B // 2)
        while N % B:
            B -= 1
    if N // B > 1 and (B * (H + 2)) % 8 != 0:
        B = N                              # fall back to one full-array block
    G = N // B
    Mp = B * (H + 2)
    Mo = Mp - 2

    # NCHW -> lane-dense (N, H, W*Cin) bf16, one zero pad row above/below each
    # image, then stack B images per grid step along the sublane axis.
    x_f = jnp.transpose(x_nchw, (0, 2, 3, 1)).reshape(N, H, WCin).astype(jnp.bfloat16)
    x_slab = jnp.pad(x_f, ((0, 0), (1, 1), (0, 0))).reshape(G * Mp, WCin)

    # Conv-output row j is valid iff its centre slab row j+1 is a real image row.
    k = (jnp.arange(Mo) + 1) % (H + 2)
    row_mask = ((k >= 1) & (k <= H)).astype(jnp.float32).reshape(Mo, 1)

    out = pl.pallas_call(
        basic_block_kernel,
        out_shape=jax.ShapeDtypeStruct((G * Mp, WCout), jnp.float32),
        grid=(G,),
        in_specs=[
            pl.BlockSpec((Mp, WCin), lambda g: (g, 0)),          # input slab
            pl.BlockSpec(kp["w1k"].shape, lambda g: (0, 0)),     # conv1+shortcut weights
            pl.BlockSpec(kp["w2k"].shape, lambda g: (0, 0)),     # conv2 weights
            pl.BlockSpec((1, WCout), lambda g: (0, 0)),          # bn1 bias
            pl.BlockSpec((1, WCout), lambda g: (0, 0)),          # bn2 bias
            pl.BlockSpec((1, WCout), lambda g: (0, 0)),          # shortcut-bn bias
            pl.BlockSpec((Mo, 1), lambda g: (0, 0)),             # valid-row mask
        ],
        out_specs=pl.BlockSpec((Mp, WCout), lambda g: (g, 0)),
        scratch_shapes=[pltpu.VMEM((Mp, WCout), jnp.float32)],   # shortcut stash
        compiler_params=pltpu.CompilerParams(
            dimension_semantics=("parallel",),
            vmem_limit_bytes=32 * 1024 * 1024),
    )(x_slab, kp["w1k"], kp["w2k"], kp["b1f"], kp["b2f"], kp["bscf"], row_mask)

    # Strip the per-image pad/garbage rows and go back to NCHW.
    out = out.reshape(G, B, H + 2, W, Cmid)[:, :, :H]
    return jnp.transpose(out.reshape(N, H, W, Cmid), (0, 3, 1, 2))


# ----------------------------- parameter prep -----------------------------

def fold_bn(gamma, beta, mean, var, eps=1e-5):
    scale = gamma / jnp.sqrt(var + eps)
    bias = beta - mean * scale
    return scale, bias


def make_raw_params(key, cin, cmid):
    ks = jax.random.split(key, 6)
    w1 = 0.1 * jax.random.normal(ks[0], (3, 3, cin, cmid), jnp.float32)    # HWIO
    w2 = 0.1 * jax.random.normal(ks[1], (3, 3, cmid, cmid), jnp.float32)
    wsc = 0.1 * jax.random.normal(ks[2], (1, 1, cin, cmid), jnp.float32)

    def bn(k):
        k1, k2, k3, k4 = jax.random.split(k, 4)
        gamma = jax.random.uniform(k1, (cmid,), jnp.float32, 0.5, 1.5)
        beta = 0.1 * jax.random.normal(k2, (cmid,), jnp.float32)
        mean = 0.1 * jax.random.normal(k3, (cmid,), jnp.float32)
        var = jax.random.uniform(k4, (cmid,), jnp.float32, 0.5, 1.5)
        return (gamma, beta, mean, var)

    return {"w1": w1, "w2": w2, "wsc": wsc,
            "bn1": bn(ks[3]), "bn2": bn(ks[4]), "bnsc": bn(ks[5])}


def prepare_kernel_params(raw, W):
    """Block-banded, BN-scale-folded, K-stacked bf16 weights + folded biases."""
    cin, cmid = raw["w1"].shape[2], raw["w1"].shape[3]
    WCin, WCout = W * cin, W * cmid
    assert WCout == 128 and WCin <= 128, "lane-dense layout assumption violated"

    s1, b1 = fold_bn(*raw["bn1"])
    s2, b2 = fold_bn(*raw["bn2"])
    ssc, bsc = fold_bn(*raw["bnsc"])

    def band(dx):
        # B[iw, ow] = 1 iff iw == ow + dx - 1; out-of-range taps (W padding) drop out
        return jnp.eye(W, k=1 - dx, dtype=jnp.float32)

    def banded(w_row, scale):
        # w_row: (3, Ci, Co) taps for dx=0..2; BN scale folded into output columns
        return sum(jnp.kron(band(dx), w_row[dx] * scale[None, :]) for dx in range(3))

    m1 = [banded(raw["w1"][dy], s1) for dy in range(3)]       # (W*Cin,  W*Cmid)
    m2 = [banded(raw["w2"][dy], s2) for dy in range(3)]       # (W*Cmid, W*Cmid)
    msc = jnp.kron(jnp.eye(W, dtype=jnp.float32), raw["wsc"][0, 0] * ssc[None, :])
    zsc = jnp.zeros_like(msc)

    # Kernel rows stacked along K to match lhs = [up | cen | dn]; the shortcut
    # occupies extra output columns of the centre K-block only.
    w1k = jnp.concatenate([
        jnp.concatenate([m1[0], zsc], axis=1),
        jnp.concatenate([m1[1], msc], axis=1),
        jnp.concatenate([m1[2], zsc], axis=1)], axis=0).astype(jnp.bfloat16)
    w2k = jnp.concatenate(m2, axis=0).astype(jnp.bfloat16)

    return {
        "cmid": cmid,
        "w1k": w1k,                                   # (3*W*Cin,  2*W*Cmid)
        "w2k": w2k,                                   # (3*W*Cmid,   W*Cmid)
        "b1f": jnp.tile(b1, W).reshape(1, WCout),
        "b2f": jnp.tile(b2, W).reshape(1, WCout),
        "bscf": jnp.tile(bsc, W).reshape(1, WCout),
    }


# ----------------------------- pure-JAX reference -----------------------------

def ref_forward(x_nchw, raw):
    dn = ("NHWC", "HWIO", "NHWC")
    s1, b1 = fold_bn(*raw["bn1"])
    s2, b2 = fold_bn(*raw["bn2"])
    ssc, bsc = fold_bn(*raw["bnsc"])
    x = jnp.transpose(x_nchw, (0, 2, 3, 1))
    c1 = lax.conv_general_dilated(x, raw["w1"], (1, 1), "SAME", dimension_numbers=dn)
    o1 = jnp.maximum(c1 * s1 + b1, 0.0)
    c2 = lax.conv_general_dilated(o1, raw["w2"], (1, 1), "SAME", dimension_numbers=dn)
    o2 = c2 * s2 + b2
    csc = lax.conv_general_dilated(x, raw["wsc"], (1, 1), "SAME", dimension_numbers=dn)
    sc = csc * ssc + bsc
    return jnp.transpose(jnp.maximum(o2 + sc, 0.0), (0, 3, 1, 2))


if __name__ == "__main__":
    key = jax.random.PRNGKey(0)
    k_x, k_p = jax.random.split(key)

    N, Cin, H, W = 16, 4, 16, 16
    Cmid = 8  # planes (expansion=1); in_planes != planes -> 1x1-conv+BN shortcut

    x = jax.random.normal(k_x, (N, Cin, H, W), jnp.float32)
    raw = make_raw_params(k_p, Cin, Cmid)
    kparams = prepare_kernel_params(raw, W)

    out = jax.block_until_ready(basic_block_forward(x, kparams, batch_tile=8))
    ref = jax.block_until_ready(ref_forward(x, raw))

    assert out.shape == (N, Cmid, H, W)
    max_err = jnp.max(jnp.abs(out - ref))
    assert jnp.allclose(out, ref, atol=5e-2, rtol=5e-2), f"max err {max_err}"

    print("KERNEL_OK")
</pallas_src>

<mosaic_0001>
module attributes {stable_mosaic.version = 11 : i64} {
  func.func @basic_block_kernel(%arg0: i32, %arg1: memref<144x64xbf16, #tpu.memory_space<vmem>>, %arg2: memref<192x256xbf16, #tpu.memory_space<vmem>>, %arg3: memref<384x128xbf16, #tpu.memory_space<vmem>>, %arg4: memref<1x128xf32, #tpu.memory_space<vmem>>, %arg5: memref<1x128xf32, #tpu.memory_space<vmem>>, %arg6: memref<1x128xf32, #tpu.memory_space<vmem>>, %arg7: memref<142x1xf32, #tpu.memory_space<vmem>>, %arg8: memref<144x128xf32, #tpu.memory_space<vmem>>, %arg9: memref<144x128xf32, #tpu.memory_space<vmem>>) attributes {dimension_semantics = [#tpu.dimension_semantics<parallel>], iteration_bounds = array<i64: 2>, scalar_prefetch = 0 : i64, scratch_operands = 1 : i64, tpu.core_type = #tpu.core_type<tc>, window_params = [{transform_indices = @transform_0, window_bounds = array<i64: 144, 64>}, {pipeline_mode = #tpu.pipeline_mode<synchronous>, transform_indices = @transform_1, window_bounds = array<i64: 192, 256>}, {pipeline_mode = #tpu.pipeline_mode<synchronous>, transform_indices = @transform_2, window_bounds = array<i64: 384, 128>}, {pipeline_mode = #tpu.pipeline_mode<synchronous>, transform_indices = @transform_3, window_bounds = array<i64: 1, 128>}, {pipeline_mode = #tpu.pipeline_mode<synchronous>, transform_indices = @transform_4, window_bounds = array<i64: 1, 128>}, {pipeline_mode = #tpu.pipeline_mode<synchronous>, transform_indices = @transform_5, window_bounds = array<i64: 1, 128>}, {pipeline_mode = #tpu.pipeline_mode<synchronous>, transform_indices = @transform_6, window_bounds = array<i64: 142, 1>}, {transform_indices = @transform_7, window_bounds = array<i64: 144, 128>}]} {
    %c0 = arith.constant 0 : index
    %c0_0 = arith.constant 0 : index
    %0 = vector.load %arg1[%c0, %c0_0] : memref<144x64xbf16, #tpu.memory_space<vmem>>, vector<144x64xbf16>
    %1 = arith.extf %0 : vector<144x64xbf16> to vector<144x64xf32>
    %2 = vector.extract_strided_slice %1 {offsets = [0, 0], sizes = [142, 64], strides = [1, 1]} : vector<144x64xf32> to vector<142x64xf32>
    %3 = arith.truncf %2 : vector<142x64xf32> to vector<142x64xbf16>
    %4 = vector.extract_strided_slice %1 {offsets = [1, 0], sizes = [142, 64], strides = [1, 1]} : vector<144x64xf32> to vector<142x64xf32>
    %5 = arith.truncf %4 : vector<142x64xf32> to vector<142x64xbf16>
    %6 = vector.extract_strided_slice %1 {offsets = [2, 0], sizes = [142, 64], strides = [1, 1]} : vector<144x64xf32> to vector<142x64xf32>
    %7 = arith.truncf %6 : vector<142x64xf32> to vector<142x64xbf16>
    %8 = tpu.concatenate %3, %5, %7 in 1 : vector<142x64xbf16>, vector<142x64xbf16>, vector<142x64xbf16> -> vector<142x192xbf16>
    %c0_1 = arith.constant 0 : index
    %c0_2 = arith.constant 0 : index
    %9 = vector.load %arg2[%c0_1, %c0_2] : memref<192x256xbf16, #tpu.memory_space<vmem>>, vector<192x256xbf16>
    %cst = arith.constant dense<0.000000e+00> : vector<142x256xf32>
    %10 = tpu.matmul %8, %9, %cst {dimension_numbers = #tpu.dot_dimension_numbers<[1], [0], [0], [1], [0, 0, 1, 1], [], []>} : vector<142x192xbf16>, vector<192x256xbf16>, vector<142x256xf32> -> vector<142x256xf32>
    %11 = vector.extract_strided_slice %10 {offsets = [0, 128], sizes = [142, 128], strides = [1, 1]} : vector<142x256xf32> to vector<142x128xf32>
    %c0_3 = arith.constant 0 : index
    %c0_4 = arith.constant 0 : index
    %12 = vector.load %arg6[%c0_3, %c0_4] : memref<1x128xf32, #tpu.memory_space<vmem>>, vector<1x128xf32>
    %13 = vector.broadcast %12 : vector<1x128xf32> to vector<142x128xf32>
    %14 = arith.addf %11, %13 : vector<142x128xf32>
    %c0_5 = arith.constant 0 : index
    %c0_6 = arith.constant 0 : index
    %15 = vector.load %arg9[%c0_5, %c0_6] : memref<144x128xf32, #tpu.memory_space<vmem>>, vector<142x128xf32>
    tpu.vector_store %arg9[%c0_5, %c0_6], %14 {strides = array<i32>} : memref<144x128xf32, #tpu.memory_space<vmem>>, vector<142x128xf32>,
    %16 = vector.extract_strided_slice %10 {offsets = [0, 0], sizes = [142, 128], strides = [1, 1]} : vector<142x256xf32> to vector<142x128xf32>
    %c0_7 = arith.constant 0 : index
    %c0_8 = arith.constant 0 : index
    %17 = vector.load %arg4[%c0_7, %c0_8] : memref<1x128xf32, #tpu.memory_space<vmem>>, vector<1x128xf32>
    %18 = vector.broadcast %17 : vector<1x128xf32> to vector<142x128xf32>
    %19 = arith.addf %16, %18 : vector<142x128xf32>
    %cst_9 = arith.constant 0.000000e+00 : f32
    %20 = vector.broadcast %cst_9 : f32 to vector<142x128xf32>
    %21 = arith.maximumf %19, %20 : vector<142x128xf32>
    %c0_10 = arith.constant 0 : index
    %c0_11 = arith.constant 0 : index
    %22 = vector.load %arg7[%c0_10, %c0_11] : memref<142x1xf32, #tpu.memory_space<vmem>>, vector<142x1xf32>
    %23 = vector.broadcast %22 : vector<142x1xf32> to vector<142x128xf32>
    %24 = arith.mulf %21, %23 : vector<142x128xf32>
    %cst_12 = arith.constant 0.000000e+00 : f32
    %25 = vector.broadcast %cst_12 : f32 to vector<1x128xf32>
    %26 = vector.extract_strided_slice %24 {offsets = [0, 0], sizes = [141, 128], strides = [1, 1]} : vector<142x128xf32> to vector<141x128xf32>
    %27 = tpu.concatenate %25, %26 in 0 : vector<1x128xf32>, vector<141x128xf32> -> vector<142x128xf32>
    %28 = vector.extract_strided_slice %24 {offsets = [1, 0], sizes = [141, 128], strides = [1, 1]} : vector<142x128xf32> to vector<141x128xf32>
    %29 = tpu.concatenate %28, %25 in 0 : vector<141x128xf32>, vector<1x128xf32> -> vector<142x128xf32>
    %30 = arith.truncf %27 : vector<142x128xf32> to vector<142x128xbf16>
    %31 = arith.truncf %24 : vector<142x128xf32> to vector<142x128xbf16>
    %32 = arith.truncf %29 : vector<142x128xf32> to vector<142x128xbf16>
    %33 = tpu.concatenate %30, %31, %32 in 1 : vector<142x128xbf16>, vector<142x128xbf16>, vector<142x128xbf16> -> vector<142x384xbf16>
    %c0_13 = arith.constant 0 : index
    %c0_14 = arith.constant 0 : index
    %34 = vector.load %arg3[%c0_13, %c0_14] : memref<384x128xbf16, #tpu.memory_space<vmem>>, vector<384x128xbf16>
    %cst_15 = arith.constant dense<0.000000e+00> : vector<142x128xf32>
    %35 = tpu.matmul %33, %34, %cst_15 {dimension_numbers = #tpu.dot_dimension_numbers<[1], [0], [0], [1], [0, 0, 1, 1], [], []>} : vector<142x384xbf16>, vector<384x128xbf16>, vector<142x128xf32> -> vector<142x128xf32>
    %c0_16 = arith.constant 0 : index
    %c0_17 = arith.constant 0 : index
    %36 = vector.load %arg5[%c0_16, %c0_17] : memref<1x128xf32, #tpu.memory_space<vmem>>, vector<1x128xf32>
    %37 = vector.broadcast %36 : vector<1x128xf32> to vector<142x128xf32>
    %38 = arith.addf %35, %37 : vector<142x128xf32>
    %c0_18 = arith.constant 0 : index
    %c0_19 = arith.constant 0 : index
    %39 = vector.load %arg9[%c0_18, %c0_19] : memref<144x128xf32, #tpu.memory_space<vmem>>, vector<142x128xf32>
    %40 = arith.addf %38, %39 : vector<142x128xf32>
    %cst_20 = arith.constant 0.000000e+00 : f32
    %41 = vector.broadcast %cst_20 : f32 to vector<142x128xf32>
    %42 = arith.maximumf %40, %41 : vector<142x128xf32>
    %c0_21 = arith.constant 0 : index
    %c0_22 = arith.constant 0 : index
    %43 = vector.load %arg8[%c0_21, %c0_22] : memref<144x128xf32, #tpu.memory_space<vmem>>, vector<142x128xf32>
    tpu.vector_store %arg8[%c0_21, %c0_22], %42 {strides = array<i32>} : memref<144x128xf32, #tpu.memory_space<vmem>>, vector<142x128xf32>,
    %cst_23 = arith.constant 0.000000e+00 : f32
    %44 = vector.broadcast %cst_23 : f32 to vector<2x128xf32>
    %c142 = arith.constant 142 : index
    %c0_24 = arith.constant 0 : index
    %45 = vector.load %arg8[%c142, %c0_24] : memref<144x128xf32, #tpu.memory_space<vmem>>, vector<2x128xf32>
    tpu.vector_store %arg8[%c142, %c0_24], %44 {strides = array<i32>} : memref<144x128xf32, #tpu.memory_space<vmem>>, vector<2x128xf32>,
    return
  }
  func.func @transform_0(%arg0: i32) -> (i32, i32) {
    %c0_i32 = arith.constant 0 : i32
    %c0_i32_0 = arith.constant 0 : i32
    return %arg0, %c0_i32 : i32, i32
  }
  func.func @transform_1(%arg0: i32) -> (i32, i32) {
    %c0_i32 = arith.constant 0 : i32
    %c0_i32_0 = arith.constant 0 : i32
    %c0_i32_1 = arith.constant 0 : i32
    return %c0_i32, %c0_i32_0 : i32, i32
  }
  func.func @transform_2(%arg0: i32) -> (i32, i32) {
    %c0_i32 = arith.constant 0 : i32
    %c0_i32_0 = arith.constant 0 : i32
    %c0_i32_1 = arith.constant 0 : i32
    return %c0_i32, %c0_i32_0 : i32, i32
  }
  func.func @transform_3(%arg0: i32) -> (i32, i32) {
    %c0_i32 = arith.constant 0 : i32
    %c0_i32_0 = arith.constant 0 : i32
    %c0_i32_1 = arith.constant 0 : i32
    return %c0_i32, %c0_i32_0 : i32, i32
  }
  func.func @transform_4(%arg0: i32) -> (i32, i32) {
    %c0_i32 = arith.constant 0 : i32
    %c0_i32_0 = arith.constant 0 : i32
    %c0_i32_1 = arith.constant 0 : i32
    return %c0_i32, %c0_i32_0 : i32, i32
  }
  func.func @transform_5(%arg0: i32) -> (i32, i32) {
    %c0_i32 = arith.constant 0 : i32
    %c0_i32_0 = arith.constant 0 : i32
    %c0_i32_1 = arith.constant 0 : i32
    return %c0_i32, %c0_i32_0 : i32, i32
  }
  func.func @transform_6(%arg0: i32) -> (i32, i32) {
    %c0_i32 = arith.constant 0 : i32
    %c0_i32_0 = arith.constant 0 : i32
    %c0_i32_1 = arith.constant 0 : i32
    return %c0_i32, %c0_i32_0 : i32, i32
  }
  func.func @transform_7(%arg0: i32) -> (i32, i32) {
    %c0_i32 = arith.constant 0 : i32
    %c0_i32_0 = arith.constant 0 : i32
    return %arg0, %c0_i32 : i32, i32
  }
}

</mosaic_0001>

<llo_original>
// kernel: tpu_custom_call.1
$region0: #{tpu_custom_call.1}
  #allocation0 [shape = 'u32[]', space=smem, size = 0x4, offset = 0x4, fixed_abs, tag = 'smem constant byte address 0x4 - core index']
  #allocation1 [shape = 'u32[144,128]{1,0:T(1,128)}', space=vmem, size = 0x12000, scoped, tag = 'internal scratch']
  #allocation2 [shape = 'f32[144,128]{1,0:T(8,128)}', space=vmem, size = 0x12000, scoped, tag = 'scratch operand']
  %s0 = inlined_call_operand.vmem [shape: bf16[288,64], index: 0, kind: input, shape index: {}]
  %s1 = inlined_call_operand.vmem [shape: bf16[192,256], index: 1, kind: input, shape index: {}]
  %s2 = inlined_call_operand.vmem [shape: bf16[384,128], index: 2, kind: input, shape index: {}]
  %s3 = inlined_call_operand.vmem [shape: f32[1,128], index: 3, kind: input, shape index: {}]
  %s4 = inlined_call_operand.vmem [shape: f32[1,128], index: 4, kind: input, shape index: {}]
  %s5 = inlined_call_operand.vmem [shape: f32[1,128], index: 5, kind: input, shape index: {}]
  %s6 = inlined_call_operand.vmem [shape: f32[142,1], index: 6, kind: input, shape index: {}]
  %s7 = inlined_call_operand.hbm [shape: f32[288,128], index: 7, kind: output, shape index: {}]
  %s8 = sld [smem:[#allocation0]]
  $region61: #{tpu_custom_call.1} parent=0
    _
  %s10 = ssub.s32 1, %s8
  %s11 = scalar_select 0, %s10, %s8
  $region1: #{tpu_custom_call.1} parent=0
    #allocation3 [shape = 'u8[147456]{0}', space=vmem, size = 0x24000, scoped, tag = 'output window, operand 0']
    #allocation4 [shape = 's32[2]{0}', space=sflag, size = 0x8, scoped, tag = 'scoped memory for tpu_custom_call.1']
    %12 = vsyncpa [#allocation4], 0
    %s13 = scalar_lea.sflag [#allocation4], 1
    %14 = vsyncpa %s13, 0
    loop: start=0, step=1, limit=4
    $region2: #{tpu_custom_call.1} parent=1 // loop_pre_header
      _
    $region3: #{tpu_custom_call.1} parent=1 // loop_header
      %s16 = sphi 0, %s20
      %p17 = scmp.ge.s32.totalorder %s16, 4
      %s26 = sphi 0, %s28
      %s29 = sphi 0, %s26
      %s30 = sphi 0, %s29
      %s46 = sphi 0, %s30
      %s50 = sphi 0, %s50
      %s52 = sphi 0, %s50
      %s53 = sphi 0, %s52
      %s67 = sphi 0, %s53
      %s71 = sphi 0, %s71
      %s73 = sphi 0, %s71
      %s74 = sphi 0, %s73
      %s88 = sphi 0, %s74
      %s92 = sphi 0, %s92
      %s94 = sphi 0, %s92
      %s95 = sphi 0, %s94
      %s109 = sphi 0, %s95
      %s113 = sphi 0, %s113
      %s115 = sphi 0, %s113
      %s116 = sphi 0, %s115
      %s130 = sphi 0, %s116
      %s134 = sphi 0, %s134
      %s136 = sphi 0, %s134
      %s137 = sphi 0, %s136
      %s151 = sphi 0, %s137
      %s155 = sphi 0, %s155
      %s157 = sphi 0, %s155
      %s158 = sphi 0, %s157
      %s172 = sphi 0, %s158
      %s178 = sphi 0, %s180
      %s181 = sphi 0, %s178
      %s182 = sphi 0, %s181
      %s198 = sphi 0, %s182
    $region4: #{tpu_custom_call.1} parent=1 // loop_header_branch
      %19 = sbr.rel (%p17) target = $region8
    $region5: #{tpu_custom_call.1} parent=1 // loop_body
      %s21 = ssub.s32 %s16, 1
      %s22 = ssub.s32 %s16, 2
      %s23 = sadd.s32 %s16, 1
      %s24 = ssub.s32 %s16, %s23
      %p25 = scmp.eq.s32.totalorder %s24, 0
      %s27 = sadd.s32 %s26, 1
      %s28 = scalar_select %p25, %s26, %s27
      %p31 = pneg %p25
      %p32 = scmp.eq.s32.totalorder %s16, 1
      %p33 = por %p31, %p32
      %p34 = scmp.ne.s32.totalorder %s26, %s29
      %p35 = scmp.eq.s32.totalorder %s16, 0
      %p36 = por %p34, %p35
      %p37 = scmp.ne.s32.totalorder %s26, %s29
      %p38 = scmp.eq.s32.totalorder %s21, 1
      %p39 = por %p37, %p38
      %p40 = scmp.ne.s32.totalorder %s29, %s30
      %p41 = scmp.eq.s32.totalorder %s21, 0
      %p42 = por %p40, %p41
      %p43 = scmp.ne.s32.totalorder %s29, %s30
      %p44 = scmp.eq.s32.totalorder %s22, 1
      %p45 = por %p43, %p44
      %p47 = scmp.ne.s32.totalorder %s30, %s46
      %p48 = scmp.eq.s32.totalorder %s22, 0
      %p49 = por %p47, %p48
      %s51 = sadd.s32 %s50, 1
      %p54 = scmp.eq.s32.totalorder %s16, 1
      %p55 = scmp.ne.s32.totalorder %s50, %s52
      %p56 = scmp.eq.s32.totalorder %s16, 0
      %p57 = por %p55, %p56
      %p58 = scmp.ne.s32.totalorder %s50, %s52
      %p59 = scmp.eq.s32.totalorder %s21, 1
      %p60 = por %p58, %p59
      %p61 = scmp.ne.s32.totalorder %s52, %s53
      %p62 = scmp.eq.s32.totalorder %s21, 0
      %p63 = por %p61, %p62
      %p64 = scmp.ne.s32.totalorder %s52, %s53
      %p65 = scmp.eq.s32.totalorder %s22, 1
      %p66 = por %p64, %p65
      %p68 = scmp.ne.s32.totalorder %s53, %s67
      %p69 = scmp.eq.s32.totalorder %s22, 0
      %p70 = por %p68, %p69
      %s72 = sadd.s32 %s71, 1
      %p75 = scmp.eq.s32.totalorder %s16, 1
      %p76 = scmp.ne.s32.totalorder %s71, %s73
      %p77 = scmp.eq.s32.totalorder %s16, 0
      %p78 = por %p76, %p77
      %p79 = scmp.ne.s32.totalorder %s71, %s73
      %p80 = scmp.eq.s32.totalorder %s21, 1
      %p81 = por %p79, %p80
      %p82 = scmp.ne.s32.totalorder %s73, %s74
      %p83 = scmp.eq.s32.totalorder %s21, 0
      %p84 = por %p82, %p83
      %p85 = scmp.ne.s32.totalorder %s73, %s74
      %p86 = scmp.eq.s32.totalorder %s22, 1
      %p87 = por %p85, %p86
      %p89 = scmp.ne.s32.totalorder %s74, %s88
      %p90 = scmp.eq.s32.totalorder %s22, 0
      %p91 = por %p89, %p90
      %s93 = sadd.s32 %s92, 1
      %p96 = scmp.eq.s32.totalorder %s16, 1
      %p97 = scmp.ne.s32.totalorder %s92, %s94
      %p98 = scmp.eq.s32.totalorder %s16, 0
      %p99 = por %p97, %p98
      %p100 = scmp.ne.s32.totalorder %s92, %s94
      %p101 = scmp.eq.s32.totalorder %s21, 1
      %p102 = por %p100, %p101
      %p103 = scmp.ne.s32.totalorder %s94, %s95
      %p104 = scmp.eq.s32.totalorder %s21, 0
      %p105 = por %p103, %p104
      %p106 = scmp.ne.s32.totalorder %s94, %s95
      %p107 = scmp.eq.s32.totalorder %s22, 1
      %p108 = por %p106, %p107
      %p110 = scmp.ne.s32.totalorder %s95, %s109
      %p111 = scmp.eq.s32.totalorder %s22, 0
      %p112 = por %p110, %p111
      %s114 = sadd.s32 %s113, 1
      %p117 = scmp.eq.s32.totalorder %s16, 1
      %p118 = scmp.ne.s32.totalorder %s113, %s115
      %p119 = scmp.eq.s32.totalorder %s16, 0
      %p120 = por %p118, %p119
      %p121 = scmp.ne.s32.totalorder %s113, %s115
      %p122 = scmp.eq.s32.totalorder %s21, 1
      %p123 = por %p121, %p122
      %p124 = scmp.ne.s32.totalorder %s115, %s116
      %p125 = scmp.eq.s32.totalorder %s21, 0
      %p126 = por %p124, %p125
      %p127 = scmp.ne.s32.totalorder %s115, %s116
      %p128 = scmp.eq.s32.totalorder %s22, 1
      %p129 = por %p127, %p128
      %p131 = scmp.ne.s32.totalorder %s116, %s130
      %p132 = scmp.eq.s32.totalorder %s22, 0
      %p133 = por %p131, %p132
      %s135 = sadd.s32 %s134, 1
      %p138 = scmp.eq.s32.totalorder %s16, 1
      %p139 = scmp.ne.s32.totalorder %s134, %s136
      %p140 = scmp.eq.s32.totalorder %s16, 0
      %p141 = por %p139, %p140
      %p142 = scmp.ne.s32.totalorder %s134, %s136
      %p143 = scmp.eq.s32.totalorder %s21, 1
      %p144 = por %p142, %p143
      %p145 = scmp.ne.s32.totalorder %s136, %s137
      %p146 = scmp.eq.s32.totalorder %s21, 0
      %p147 = por %p145, %p146
      %p148 = scmp.ne.s32.totalorder %s136, %s137
      %p149 = scmp.eq.s32.totalorder %s22, 1
      %p150 = por %p148, %p149
      %p152 = scmp.ne.s32.totalorder %s137, %s151
      %p153 = scmp.eq.s32.totalorder %s22, 0
      %p154 = por %p152, %p153
      %s156 = sadd.s32 %s155, 1
      %p159 = scmp.eq.s32.totalorder %s16, 1
      %p160 = scmp.ne.s32.totalorder %s155, %s157
      %p161 = scmp.eq.s32.totalorder %s16, 0
      %p162 = por %p160, %p161
      %p163 = scmp.ne.s32.totalorder %s155, %s157
      %p164 = scmp.eq.s32.totalorder %s21, 1
      %p165 = por %p163, %p164
      %p166 = scmp.ne.s32.totalorder %s157, %s158
      %p167 = scmp.eq.s32.totalorder %s21, 0
      %p168 = por %p166, %p167
      %p169 = scmp.ne.s32.totalorder %s157, %s158
      %p170 = scmp.eq.s32.totalorder %s22, 1
      %p171 = por %p169, %p170
      %p173 = scmp.ne.s32.totalorder %s158, %s172
      %p174 = scmp.eq.s32.totalorder %s22, 0
      %p175 = por %p173, %p174
      %s176 = ssub.s32 %s16, %s23
      %p177 = scmp.eq.s32.totalorder %s176, 0
      %s179 = sadd.s32 %s178, 1
      %s180 = scalar_select %p177, %s178, %s179
      %p183 = pneg %p177
      %p184 = scmp.eq.s32.totalorder %s16, 1
      %p185 = por %p183, %p184
      %p186 = scmp.ne.s32.totalorder %s178, %s181
      %p187 = scmp.eq.s32.totalorder %s16, 0
      %p188 = por %p186, %p187
      %p189 = scmp.ne.s32.totalorder %s178, %s181
      %p190 = scmp.eq.s32.totalorder %s21, 1
      %p191 = por %p189, %p190
      %p192 = scmp.ne.s32.totalorder %s181, %s182
      %p193 = scmp.eq.s32.totalorder %s21, 0
      %p194 = por %p192, %p193
      %p195 = scmp.ne.s32.totalorder %s181, %s182
      %p196 = scmp.eq.s32.totalorder %s22, 1
      %p197 = por %p195, %p196
      %p199 = scmp.ne.s32.totalorder %s182, %s198
      %p200 = scmp.eq.s32.totalorder %s22, 0
      %p201 = por %p199, %p200
      %p202 = scmp.le.s32.totalorder 1, %s16
      %p203 = scmp.lt.s32.totalorder %s16, 3
      %p204 = pnand %p202, %p203
      %p205 = pneg %p204
      // Predicated region
      $region9: #{tpu_custom_call.1} parent=5 // pred_check
        _
      $region10: #{tpu_custom_call.1} parent=5 // pred_check_branch
        %207 = sbr.rel (%p204) target = $region12
      $region11: #{tpu_custom_call.1} parent=5 // pred_region
        %s208 = ssub.s32 %s16, 1
        // Predicated region
        $region13: #{tpu_custom_call.1} parent=11 // pred_check
          %p209 = pneg %p63
        $region14: #{tpu_custom_call.1} parent=11 // pred_check_branch
          %211 = sbr.rel (%p209) target = $region16
        $region15: #{tpu_custom_call.1} parent=11 // pred_region
          _
        $region16: #{tpu_custom_call.1} parent=11 // pred_fallthru
          _
        // Predicated region
        $region17: #{tpu_custom_call.1} parent=11 // pred_check
          %p212 = pneg %p84
        $region18: #{tpu_custom_call.1} parent=11 // pred_check_branch
          %214 = sbr.rel (%p212) target = $region20
        $region19: #{tpu_custom_call.1} parent=11 // pred_region
          _
        $region20: #{tpu_custom_call.1} parent=11 // pred_fallthru
          _
        // Predicated region
        $region21: #{tpu_custom_call.1} parent=11 // pred_check
          %p215 = pneg %p105
        $region22: #{tpu_custom_call.1} parent=11 // pred_check_branch
          %217 = sbr.rel (%p215) target = $region24
        $region23: #{tpu_custom_call.1} parent=11 // pred_region
          _
        $region24: #{tpu_custom_call.1} parent=11 // pred_fallthru
          _
        // Predicated region
        $region25: #{tpu_custom_call.1} parent=11 // pred_check
          %p218 = pneg %p126
        $region26: #{tpu_custom_call.1} parent=11 // pred_check_branch
          %220 = sbr.rel (%p218) target = $region28
        $region27: #{tpu_custom_call.1} parent=11 // pred_region
          _
        $region28: #{tpu_custom_call.1} parent=11 // pred_fallthru
          _
        // Predicated region
        $region29: #{tpu_custom_call.1} parent=11 // pred_check
          %p221 = pneg %p147
        $region30: #{tpu_custom_call.1} parent=11 // pred_check_branch
          %223 = sbr.rel (%p221) target = $region32
        $region31: #{tpu_custom_call.1} parent=11 // pred_region
          _
        $region32: #{tpu_custom_call.1} parent=11 // pred_fallthru
          _
        // Predicated region
        $region33: #{tpu_custom_call.1} parent=11 // pred_check
          %p224 = pneg %p168
        $region34: #{tpu_custom_call.1} parent=11 // pred_check_branch
          %226 = sbr.rel (%p224) target = $region36
        $region35: #{tpu_custom_call.1} parent=11 // pred_region
          _
        $region36: #{tpu_custom_call.1} parent=11 // pred_fallthru
          _
      $region12: #{tpu_custom_call.1} parent=5 // pred_fallthru
        _
      %p227 = scmp.lt.s32.totalorder %s16, 2
      // Predicated region
      $region37: #{tpu_custom_call.1} parent=5 // pred_check
        %p228 = pneg %p227
      $region38: #{tpu_custom_call.1} parent=5 // pred_check_branch
        %230 = sbr.rel (%p228) target = $region40
      $region39: #{tpu_custom_call.1} parent=5 // pred_region
        // Predicated region
        $region41: #{tpu_custom_call.1} parent=39 // pred_check
          %p231 = pneg %p36
        $region42: #{tpu_custom_call.1} parent=39 // pred_check_branch
          %233 = sbr.rel (%p231) target = $region44
        $region43: #{tpu_custom_call.1} parent=39 // pred_region
          %s234 = smul.u32 18, %s16
          %p235 = scmp.lt.s32.totalorder %s234, 35
          %s236 = scalar_select %p235, %s234, 35
          %s237 = smul.addr %s236, 4
          %s238 = scalar_lea.vmem %s0, %s237
          %s239 = smul.u32 18, %s16
        $region44: #{tpu_custom_call.1} parent=39 // pred_fallthru
          _
      $region40: #{tpu_custom_call.1} parent=5 // pred_fallthru
        _
      %p240 = scmp.le.s32.totalorder 1, %s16
      %p241 = scmp.lt.s32.totalorder %s16, 3
      %p242 = pnand %p240, %p241
      %p243 = pneg %p242
      // Predicated region
      $region45: #{tpu_custom_call.1} parent=5 // pred_check
        _
      $region46: #{tpu_custom_call.1} parent=5 // pred_check_branch
        %245 = sbr.rel (%p242) target = $region48
      $region47: #{tpu_custom_call.1} parent=5 // pred_region
        %s246 = ssub.s32 %s16, 1
        %s247 = smul.u32 18, %s21
        %p248 = scmp.lt.s32.totalorder %s247, 35
        %s249 = scalar_select %p248, %s247, 35
        %s250 = smul.addr %s249, 4
        %s251 = scalar_lea.vmem %s0, %s250
        %p252 = pneg %p42
        %p253 = pneg %p39
        %p254 = pneg %p63
        %p255 = pneg %p60
        %p256 = pneg %p84
        %p257 = pneg %p81
        %p258 = pneg %p105
        %p259 = pneg %p102
        %p260 = pneg %p126
        %p261 = pneg %p123
        %p262 = pneg %p147
        %p263 = pneg %p144
        %p264 = pneg %p168
        %p265 = pneg %p165
        %p266 = pneg %p194
        %p267 = pneg %p191
        %s268 = sand.u32 %s181, 1
        %s269 = scalar_lea.sflag [#allocation4], %s268
        %s270 = sand.u32 %s181, 1
        %s271 = smul.addr %s270, 144
        %s272 = scalar_lea.vmem [#allocation3], %s271
        %s273 = smul.u32 18, %s21
        %p274 = scmp.lt.s32.totalorder %s273, 35
        %s275 = scalar_select %p274, %s273, 35
        %s276 = smul.addr %s275, 4
        %s277 = scalar_lea.vmem %s0, %s276
        %s278 = smul.u32 18, %s21
        %s279 = smul.u32 18, %s21
        %v281 = vld [vmem:[%s277] sm:$0xf]
        %v282 = vld [vmem:[%s277 + $0x4] sm:$0xf]
        %v283 = vld [vmem:[%s277 + $0x8] sm:$0xf]
        %v284 = vld [vmem:[%s277 + $0xc] sm:$0xf]
        %v285 = vld [vmem:[%s277 + $0x10] sm:$0xf]
        %v286 = vld [vmem:[%s277 + $0x14] sm:$0xf]
        %v287 = vld [vmem:[%s277 + $0x18] sm:$0xf]
        %v288 = vld [vmem:[%s277 + $0x1c] sm:$0xf]
        %v289 = vld [vmem:[%s277 + $0x20] sm:$0xf]
        %v290 = vld [vmem:[%s277 + $0x24] sm:$0xf]
        %v291 = vld [vmem:[%s277 + $0x28] sm:$0xf]
        %v292 = vld [vmem:[%s277 + $0x2c] sm:$0xf]
        %v293 = vld [vmem:[%s277 + $0x30] sm:$0xf]
        %v294 = vld [vmem:[%s277 + $0x34] sm:$0xf]
        %v295 = vld [vmem:[%s277 + $0x38] sm:$0xf]
        %v296 = vld [vmem:[%s277 + $0x3c] sm:$0xf]
        %v297 = vld [vmem:[%s277 + $0x40] sm:$0xf]
        %v298 = vld [vmem:[%s277 + $0x44] sm:$0xf]
        %v299 = vunpack.c.l.bf16 %v281
        %v300 = vunpack.c.l.bf16 %v282
        %v301 = vunpack.c.l.bf16 %v283
        %v302 = vunpack.c.l.bf16 %v284
        %v303 = vunpack.c.l.bf16 %v285
        %v304 = vunpack.c.l.bf16 %v286
        %v305 = vunpack.c.l.bf16 %v287
        %v306 = vunpack.c.l.bf16 %v288
        %v307 = vunpack.c.l.bf16 %v289
        %v308 = vunpack.c.l.bf16 %v290
        %v309 = vunpack.c.l.bf16 %v291
        %v310 = vunpack.c.l.bf16 %v292
        %v311 = vunpack.c.l.bf16 %v293
        %v312 = vunpack.c.l.bf16 %v294
        %v313 = vunpack.c.l.bf16 %v295
        %v314 = vunpack.c.l.bf16 %v296
        %v315 = vunpack.c.l.bf16 %v297
        %v316 = vunpack.c.l.bf16 %v298
        %v317 = vpack.c.bf16 %v300, %v299
        %v318 = vpack.c.bf16 %v302, %v301
        %v319 = vpack.c.bf16 %v304, %v303
        %v320 = vpack.c.bf16 %v306, %v305
        %v321 = vpack.c.bf16 %v308, %v307
        %v322 = vpack.c.bf16 %v310, %v309
        %v323 = vpack.c.bf16 %v312, %v311
        %v324 = vpack.c.bf16 %v314, %v313
        %v325 = vpack.c.bf16 %v316, %v315
        %vm326 = vsmask.f32 7424
        %v328 = vshrl.u32 %v317, 16
        %v330 = vshll.u32 %v317, 16
        %v332 = vrot.slane %v330, 1
        %v333 = vor.u32 %v328, %v332
        %v335 = vshll.u32 %v318, 16
        %v337 = vrot.slane %v335, 1
        %v338 = vsel %vm326, %v333, %v337
        %v339 = vshrl.u32 %v318, 16
        %v341 = vor.u32 %v339, %v337
        %v343 = vshll.u32 %v319, 16
        %v345 = vrot.slane %v343, 1
        %v346 = vsel %vm326, %v341, %v345
        %v347 = vshrl.u32 %v319, 16
        %v349 = vor.u32 %v347, %v345
        %v351 = vshll.u32 %v320, 16
        %v353 = vrot.slane %v351, 1
        %v354 = vsel %vm326, %v349, %v353
        %v355 = vshrl.u32 %v320, 16
        %v357 = vor.u32 %v355, %v353
        %v359 = vshll.u32 %v321, 16
        %v361 = vrot.slane %v359, 1
        %v362 = vsel %vm326, %v357, %v361
        %v363 = vshrl.u32 %v321, 16
        %v365 = vor.u32 %v363, %v361
        %v367 = vshll.u32 %v322, 16
        %v369 = vrot.slane %v367, 1
        %v370 = vsel %vm326, %v365, %v369
        %v371 = vshrl.u32 %v322, 16
        %v373 = vor.u32 %v371, %v369
        %v375 = vshll.u32 %v323, 16
        %v377 = vrot.slane %v375, 1
        %v378 = vsel %vm326, %v373, %v377
        %v379 = vshrl.u32 %v323, 16
        %v381 = vor.u32 %v379, %v377
        %v383 = vshll.u32 %v324, 16
        %v385 = vrot.slane %v383, 1
        %v386 = vsel %vm326, %v381, %v385
        %v387 = vshrl.u32 %v324, 16
        %v389 = vor.u32 %v387, %v385
        %v391 = vshll.u32 %v325, 16
        %v393 = vrot.slane %v391, 1
        %v394 = vsel %vm326, %v389, %v393
        %v395 = vshrl.u32 %v325, 16
        %v397 = vor.u32 %v395, %v393
        %398 = vrot.lane.b32.xlu0 %v338, 64
        %v399 = vpop.permute.xlu0 %398
        %400 = vrot.lane.b32.xlu0 %v346, 64
        %v401 = vpop.permute.xlu0 %400
        %402 = vrot.lane.b32.xlu0 %v354, 64
        %v403 = vpop.permute.xlu0 %402
        %404 = vrot.lane.b32.xlu0 %v362, 64
        %v405 = vpop.permute.xlu0 %404
        %406 = vrot.lane.b32.xlu0 %v370, 64
        %v407 = vpop.permute.xlu0 %406
        %408 = vrot.lane.b32.xlu0 %v378, 64
        %v409 = vpop.permute.xlu0 %408
        %410 = vrot.lane.b32.xlu0 %v386, 64
        %v411 = vpop.permute.xlu0 %410
        %412 = vrot.lane.b32.xlu0 %v394, 64
        %v413 = vpop.permute.xlu0 %412
        %414 = vrot.lane.b32.xlu0 %v397, 64
        %v415 = vpop.permute.xlu0 %414
        %vm425 = vcmask 1046528
        %v426 = vrot.slane %v317, 1
        %v427 = vrot.slane %v318, 1
        %v428 = vsel %vm425, %v426, %v427
        %v429 = vrot.slane %v319, 1
        %v430 = vsel %vm425, %v427, %v429
        %v431 = vrot.slane %v320, 1
        %v432 = vsel %vm425, %v429, %v431
        %v433 = vrot.slane %v321, 1
        %v434 = vsel %vm425, %v431, %v433
        %v435 = vrot.slane %v322, 1
        %v436 = vsel %vm425, %v433, %v435
        %v437 = vrot.slane %v323, 1
        %v438 = vsel %vm425, %v435, %v437
        %v439 = vrot.slane %v324, 1
        %v440 = vsel %vm425, %v437, %v439
        %v441 = vrot.slane %v325, 1
        %v442 = vsel %vm425, %v439, %v441
        %vm443 = vcmask 523264
        %v445 = vsel %vm443, %v317, %v399
        %v448 = vsel %vm443, %v318, %v401
        %v451 = vsel %vm443, %v319, %v403
        %v454 = vsel %vm443, %v320, %v405
        %v457 = vsel %vm443, %v321, %v407
        %v460 = vsel %vm443, %v322, %v409
        %v463 = vsel %vm443, %v323, %v411
        %v466 = vsel %vm443, %v324, %v413
        %v469 = vsel %vm443, %v325, %v415
        %v471 = vld [vmem:[%s1] sm:$0xff]
        %v472 = vld [vmem:[%s1 + $0x8] sm:$0xff]
        %v473 = vld [vmem:[%s1 + $0x10] sm:$0xff]
        %v474 = vld [vmem:[%s1 + $0x18] sm:$0xff]
        %v475 = vld [vmem:[%s1 + $0x20] sm:$0xff]
        %v476 = vld [vmem:[%s1 + $0x28] sm:$0xff]
        %v477 = vld [vmem:[%s1 + $0x30] sm:$0xff]
        %v478 = vld [vmem:[%s1 + $0x38] sm:$0xff]
        %v479 = vld [vmem:[%s1 + $0x40] sm:$0xff]
        %v480 = vld [vmem:[%s1 + $0x48] sm:$0xff]
        %v481 = vld [vmem:[%s1 + $0x50] sm:$0xff]
        %v482 = vld [vmem:[%s1 + $0x58] sm:$0xff]
        %v483 = vld [vmem:[%s1 + $0x60] sm:$0xff]
        %v484 = vld [vmem:[%s1 + $0x68] sm:$0xff]
        %v485 = vld [vmem:[%s1 + $0x70] sm:$0xff]
        %v486 = vld [vmem:[%s1 + $0x78] sm:$0xff]
        %v487 = vld [vmem:[%s1 + $0x80] sm:$0xff]
        %v488 = vld [vmem:[%s1 + $0x88] sm:$0xff]
        %v489 = vld [vmem:[%s1 + $0x90] sm:$0xff]
        %v490 = vld [vmem:[%s1 + $0x98] sm:$0xff]
        %v491 = vld [vmem:[%s1 + $0xa0] sm:$0xff]
        %v492 = vld [vmem:[%s1 + $0xa8] sm:$0xff]
        %v493 = vld [vmem:[%s1 + $0xb0] sm:$0xff]
        %v494 = vld [vmem:[%s1 + $0xb8] sm:$0xff]
        %v519 = vunpack.c.l.b16 %v471
        %v520 = vunpack.c.h.b16 %v471
        %v521 = vunpack.c.l.b16 %v472
        %v522 = vunpack.c.h.b16 %v472
        %v523 = vunpack.c.l.b16 %v473
        %v524 = vunpack.c.h.b16 %v473
        %v525 = vunpack.c.l.b16 %v474
        %v526 = vunpack.c.h.b16 %v474
        %v527 = vunpack.c.l.b16 %v475
        %v528 = vunpack.c.h.b16 %v475
        %v529 = vunpack.c.l.b16 %v476
        %v530 = vunpack.c.h.b16 %v476
        %v531 = vunpack.c.l.b16 %v477
        %v532 = vunpack.c.h.b16 %v477
        %v533 = vunpack.c.l.b16 %v478
        %v534 = vunpack.c.h.b16 %v478
        %v535 = vunpack.c.l.b16 %v479
        %v536 = vunpack.c.h.b16 %v479
        %v537 = vunpack.c.l.b16 %v480
        %v538 = vunpack.c.h.b16 %v480
        %v539 = vunpack.c.l.b16 %v481
        %v540 = vunpack.c.h.b16 %v481
        %v541 = vunpack.c.l.b16 %v482
        %v542 = vunpack.c.h.b16 %v482
        %v543 = vunpack.c.l.b16 %v483
        %v544 = vunpack.c.h.b16 %v483
        %v545 = vunpack.c.l.b16 %v484
        %v546 = vunpack.c.h.b16 %v484
        %v547 = vunpack.c.l.b16 %v485
        %v548 = vunpack.c.h.b16 %v485
        %v549 = vunpack.c.l.b16 %v486
        %v550 = vunpack.c.h.b16 %v486
        %v551 = vunpack.c.l.b16 %v487
        %v552 = vunpack.c.h.b16 %v487
        %v553 = vunpack.c.l.b16 %v488
        %v554 = vunpack.c.h.b16 %v488
        %v555 = vunpack.c.l.b16 %v489
        %v556 = vunpack.c.h.b16 %v489
        %v557 = vunpack.c.l.b16 %v490
        %v558 = vunpack.c.h.b16 %v490
        %v559 = vunpack.c.l.b16 %v491
        %v560 = vunpack.c.h.b16 %v491
        %v561 = vunpack.c.l.b16 %v492
        %v562 = vunpack.c.h.b16 %v492
        %v563 = vunpack.c.l.b16 %v493
        %v564 = vunpack.c.h.b16 %v493
        %v565 = vunpack.c.l.b16 %v494
        %v566 = vunpack.c.h.b16 %v494
        %v567 = vpack.c.b16 %v521, %v519
        %v568 = vpack.c.b16 %v522, %v520
        %v569 = vpack.c.b16 %v525, %v523
        %v570 = vpack.c.b16 %v526, %v524
        %v571 = vpack.c.b16 %v529, %v527
        %v572 = vpack.c.b16 %v530, %v528
        %v573 = vpack.c.b16 %v533, %v531
        %v574 = vpack.c.b16 %v534, %v532
        %v575 = vpack.c.b16 %v537, %v535
        %v576 = vpack.c.b16 %v538, %v536
        %v577 = vpack.c.b16 %v541, %v539
        %v578 = vpack.c.b16 %v542, %v540
        %v579 = vpack.c.b16 %v545, %v543
        %v580 = vpack.c.b16 %v546, %v544
        %v581 = vpack.c.b16 %v549, %v547
        %v582 = vpack.c.b16 %v550, %v548
        %v583 = vpack.c.b16 %v553, %v551
        %v584 = vpack.c.b16 %v554, %v552
        %v585 = vpack.c.b16 %v557, %v555
        %v586 = vpack.c.b16 %v558, %v556
        %v587 = vpack.c.b16 %v561, %v559
        %v588 = vpack.c.b16 %v562, %v560
        %v589 = vpack.c.b16 %v565, %v563
        %v590 = vpack.c.b16 %v566, %v564
        %v616 = vsel %vm443, %v428, 0
        %v619 = vsel %vm443, %v430, 0
        %v622 = vsel %vm443, %v432, 0
        %v625 = vsel %vm443, %v434, 0
        %v628 = vsel %vm443, %v436, 0
        %v631 = vsel %vm443, %v438, 0
        %v634 = vsel %vm443, %v440, 0
        %v637 = vsel %vm443, %v442, 0
        %v640 = vsel %vm443, %v441, 0
        %642 = vmatprep.subr.bf16.mxu0 %v568
        %643 = vmatpush1.bf16.msra.mxu0 %v567
        %644 = vmatprep.subr.bf16.mxu0 %v570
        %645 = vmatpush1.bf16.msra.mxu0 %v569
        %646 = vmatprep.subr.bf16.mxu0 %v572
        %647 = vmatpush1.bf16.msra.mxu0 %v571
        %648 = vmatprep.subr.bf16.mxu0 %v574
        %649 = vmatpush1.bf16.msra.mxu0 %v573
        %650 = vmatprep.subr.bf16.mxu0 %v576
        %651 = vmatpush1.bf16.msra.mxu0 %v575
        %652 = vmatprep.subr.bf16.mxu0 %v578
        %653 = vmatpush1.bf16.msra.mxu0 %v577
        %654 = vmatprep.subr.bf16.mxu0 %v580
        %655 = vmatpush1.bf16.msra.mxu0 %v579
        %656 = vmatprep.subr.bf16.mxu0 %v582
        %657 = vmatpush1.bf16.msra.mxu0 %v581
        %658 = vmatprep.subr.bf16.mxu0 %v584
        %659 = vmatpush1.bf16.msra.mxu0 %v583
        %660 = vmatprep.subr.bf16.mxu0 %v586
        %661 = vmatpush1.bf16.msra.mxu0 %v585
        %662 = vmatprep.subr.bf16.mxu0 %v588
        %663 = vmatpush1.bf16.msra.mxu0 %v587
        %664 = vmatprep.subr.bf16.mxu0 %v590
        %665 = vmatpush1.bf16.msra.mxu0 %v589
        %666 = vmatprep.subr.bf16.mxu0 0
        %667 = vmatpush1.bf16.msra.mxu0 0
        %668 = vmatprep.subr.bf16.mxu0 0
        %669 = vmatpush1.bf16.msra.mxu0 0
        %670 = vmatprep.subr.bf16.mxu0 0
        %671 = vmatpush1.bf16.msra.mxu0 0
        %672 = vmatprep.subr.bf16.mxu0 0
        %673 = vmatpush1.bf16.msra.mxu0 0
        %674 = vmatprep.mubr.bf16.mxu0 %v616
        %675 = vmatmul.mubr.bf16.gmra.mrb[0].mxu0 %v445
        %v676 = vpop.f32.mrb[0].mxu0
        %v677 = vadd.f32 0.0, %v676
        %v678 = vpop.f32.mrb[0].mxu0
        %v679 = vadd.f32 0.0, %v678
        %v680 = vpop.f32.mrb[0].mxu0
        %v681 = vadd.f32 0.0, %v680
        %v682 = vpop.f32.mrb[0].mxu0
        %v683 = vadd.f32 0.0, %v682
        %684 = vmatprep.mubr.bf16.mxu0 %v619
        %685 = vmatmul.mubr.bf16.gmra.mrb[0].mxu0 %v448
        %v686 = vpop.f32.mrb[0].mxu0
        %v687 = vadd.f32 0.0, %v686
        %v688 = vpop.f32.mrb[0].mxu0
        %v689 = vadd.f32 0.0, %v688
        %v690 = vpop.f32.mrb[0].mxu0
        %v691 = vadd.f32 0.0, %v690
        %v692 = vpop.f32.mrb[0].mxu0
        %v693 = vadd.f32 0.0, %v692
        %694 = vmatprep.mubr.bf16.mxu0 %v622
        %695 = vmatmul.mubr.bf16.gmra.mrb[0].mxu0 %v451
        %v696 = vpop.f32.mrb[0].mxu0
        %v697 = vadd.f32 0.0, %v696
        %v698 = vpop.f32.mrb[0].mxu0
        %v699 = vadd.f32 0.0, %v698
        %v700 = vpop.f32.mrb[0].mxu0
        %v701 = vadd.f32 0.0, %v700
        %v702 = vpop.f32.mrb[0].mxu0
        %v703 = vadd.f32 0.0, %v702
        %704 = vmatprep.mubr.bf16.mxu0 %v625
        %705 = vmatmul.mubr.bf16.gmra.mrb[0].mxu0 %v454
        %v706 = vpop.f32.mrb[0].mxu0
        %v707 = vadd.f32 0.0, %v706
        %v708 = vpop.f32.mrb[0].mxu0
        %v709 = vadd.f32 0.0, %v708
        %v710 = vpop.f32.mrb[0].mxu0
        %v711 = vadd.f32 0.0, %v710
        %v712 = vpop.f32.mrb[0].mxu0
        %v713 = vadd.f32 0.0, %v712
        %714 = vmatprep.mubr.bf16.mxu0 %v628
        %715 = vmatmul.mubr.bf16.gmra.mrb[0].mxu0 %v457
        %v716 = vpop.f32.mrb[0].mxu0
        %v717 = vadd.f32 0.0, %v716
        %v718 = vpop.f32.mrb[0].mxu0
        %v719 = vadd.f32 0.0, %v718
        %v720 = vpop.f32.mrb[0].mxu0
        %v721 = vadd.f32 0.0, %v720
        %v722 = vpop.f32.mrb[0].mxu0
        %v723 = vadd.f32 0.0, %v722
        %724 = vmatprep.mubr.bf16.mxu0 %v631
        %725 = vmatmul.mubr.bf16.gmra.mrb[0].mxu0 %v460
        %v726 = vpop.f32.mrb[0].mxu0
        %v727 = vadd.f32 0.0, %v726
        %v728 = vpop.f32.mrb[0].mxu0
        %v729 = vadd.f32 0.0, %v728
        %v730 = vpop.f32.mrb[0].mxu0
        %v731 = vadd.f32 0.0, %v730
        %v732 = vpop.f32.mrb[0].mxu0
        %v733 = vadd.f32 0.0, %v732
        %734 = vmatprep.mubr.bf16.mxu0 %v634
        %735 = vmatmul.mubr.bf16.gmra.mrb[0].mxu0 %v463
        %v736 = vpop.f32.mrb[0].mxu0
        %v737 = vadd.f32 0.0, %v736
        %v738 = vpop.f32.mrb[0].mxu0
        %v739 = vadd.f32 0.0, %v738
        %v740 = vpop.f32.mrb[0].mxu0
        %v741 = vadd.f32 0.0, %v740
        %v742 = vpop.f32.mrb[0].mxu0
        %v743 = vadd.f32 0.0, %v742
        %744 = vmatprep.mubr.bf16.mxu0 %v637
        %745 = vmatmul.mubr.bf16.gmra.mrb[0].mxu0 %v466
        %v746 = vpop.f32.mrb[0].mxu0
        %v747 = vadd.f32 0.0, %v746
        %v748 = vpop.f32.mrb[0].mxu0
        %v749 = vadd.f32 0.0, %v748
        %v750 = vpop.f32.mrb[0].mxu0
        %v751 = vadd.f32 0.0, %v750
        %v752 = vpop.f32.mrb[0].mxu0
        %v753 = vadd.f32 0.0, %v752
        %754 = vmatprep.mubr.bf16.mxu0 %v640
        %755 = vmatmul.mubr.bf16.gmra.mrb[0].mxu0 %v469
        %v756 = vpop.f32.mrb[0].mxu0
        %v757 = vadd.f32 0.0, %v756
        %v758 = vpop.f32.mrb[0].mxu0
        %v759 = vadd.f32 0.0, %v758
        %v760 = vpop.f32.mrb[0].mxu0
        %v761 = vadd.f32 0.0, %v760
        %v762 = vpop.f32.mrb[0].mxu0
        %v763 = vadd.f32 0.0, %v762
        %764 = vdwg.mxu0
        %v765 = vld [vmem:[%s5] sm:$0x1]
        %v767 = vlaneseq
        %v768 = vshrl.u32 %v767, 7
        %v769 = vsub.s32 0, %v768
        %v770 = vrot.slane %v765, %v769
        %v772 = vadd.f32 %v679, %v770
        %v773 = vadd.f32 %v683, %v770
        %v774 = vadd.f32 %v689, %v770
        %v775 = vadd.f32 %v693, %v770
        %v776 = vadd.f32 %v699, %v770
        %v777 = vadd.f32 %v703, %v770
        %v778 = vadd.f32 %v709, %v770
        %v779 = vadd.f32 %v713, %v770
        %v780 = vadd.f32 %v719, %v770
        %v781 = vadd.f32 %v723, %v770
        %v782 = vadd.f32 %v729, %v770
        %v783 = vadd.f32 %v733, %v770
        %v784 = vadd.f32 %v739, %v770
        %v785 = vadd.f32 %v743, %v770
        %v786 = vadd.f32 %v749, %v770
        %v787 = vadd.f32 %v753, %v770
        %v788 = vadd.f32 %v759, %v770
        %v789 = vadd.f32 %v763, %v770
        %790 = vst [vmem:[#allocation2] sm:$0xff] %v772
        %791 = vst [vmem:[#allocation2 + $0x8] sm:$0xff] %v773
        %792 = vst [vmem:[#allocation2 + $0x10] sm:$0xff] %v774
        %793 = vst [vmem:[#allocation2 + $0x18] sm:$0xff] %v775
        %794 = vst [vmem:[#allocation2 + $0x20] sm:$0xff] %v776
        %795 = vst [vmem:[#allocation2 + $0x28] sm:$0xff] %v777
        %796 = vst [vmem:[#allocation2 + $0x30] sm:$0xff] %v778
        %797 = vst [vmem:[#allocation2 + $0x38] sm:$0xff] %v779
        %798 = vst [vmem:[#allocation2 + $0x40] sm:$0xff] %v780
        %799 = vst [vmem:[#allocation2 + $0x48] sm:$0xff] %v781
        %800 = vst [vmem:[#allocation2 + $0x50] sm:$0xff] %v782
        %801 = vst [vmem:[#allocation2 + $0x58] sm:$0xff] %v783
        %802 = vst [vmem:[#allocation2 + $0x60] sm:$0xff] %v784
        %803 = vst [vmem:[#allocation2 + $0x68] sm:$0xff] %v785
        %804 = vst [vmem:[#allocation2 + $0x70] sm:$0xff] %v786
        %805 = vst [vmem:[#allocation2 + $0x78] sm:$0xff] %v787
        %806 = vst [vmem:[#allocation2 + $0x80] sm:$0xff] %v788
        %807 = vst [vmem:[#allocation2 + $0x88] sm:$0x3f] %v789
        %v808 = vld [vmem:[%s3] sm:$0x1]
        %v810 = vlaneseq
        %v811 = vshrl.u32 %v810, 7
        %v812 = vsub.s32 0, %v811
        %v813 = vrot.slane %v808, %v812
        %v815 = vadd.f32 %v677, %v813
        %v816 = vadd.f32 %v681, %v813
        %v817 = vadd.f32 %v687, %v813
        %v818 = vadd.f32 %v691, %v813
        %v819 = vadd.f32 %v697, %v813
        %v820 = vadd.f32 %v701, %v813
        %v821 = vadd.f32 %v707, %v813
        %v822 = vadd.f32 %v711, %v813
        %v823 = vadd.f32 %v717, %v813
        %v824 = vadd.f32 %v721, %v813
        %v825 = vadd.f32 %v727, %v813
        %v826 = vadd.f32 %v731, %v813
        %v827 = vadd.f32 %v737, %v813
        %v828 = vadd.f32 %v741, %v813
        %v829 = vadd.f32 %v747, %v813
        %v830 = vadd.f32 %v751, %v813
        %v831 = vadd.f32 %v757, %v813
        %v832 = vadd.f32 %v761, %v813
        %v833 = vmax.f32 %v815, 0.0
        %v834 = vmax.f32 %v816, 0.0
        %v835 = vmax.f32 %v817, 0.0
        %v836 = vmax.f32 %v818, 0.0
        %v837 = vmax.f32 %v819, 0.0
        %v838 = vmax.f32 %v820, 0.0
        %v839 = vmax.f32 %v821, 0.0
        %v840 = vmax.f32 %v822, 0.0
        %v841 = vmax.f32 %v823, 0.0
        %v842 = vmax.f32 %v824, 0.0
        %v843 = vmax.f32 %v825, 0.0
        %v844 = vmax.f32 %v826, 0.0
        %v845 = vmax.f32 %v827, 0.0
        %v846 = vmax.f32 %v828, 0.0
        %v847 = vmax.f32 %v829, 0.0
        %v848 = vmax.f32 %v830, 0.0
        %v849 = vmax.f32 %v831, 0.0
        %v850 = vmax.f32 %v832, 0.0
        %v851 = vld [vmem:[%s6] sm:$0xff]
        %v852 = vld [vmem:[%s6 + $0x8] sm:$0xff]
        %v853 = vld [vmem:[%s6 + $0x10] sm:$0xff]
        %v854 = vld [vmem:[%s6 + $0x18] sm:$0xff]
        %v855 = vld [vmem:[%s6 + $0x20] sm:$0xff]
        %v856 = vld [vmem:[%s6 + $0x28] sm:$0xff]
        %v857 = vld [vmem:[%s6 + $0x30] sm:$0xff]
        %v858 = vld [vmem:[%s6 + $0x38] sm:$0xff]
        %v859 = vld [vmem:[%s6 + $0x40] sm:$0xff]
        %v860 = vld [vmem:[%s6 + $0x48] sm:$0xff]
        %v861 = vld [vmem:[%s6 + $0x50] sm:$0xff]
        %v862 = vld [vmem:[%s6 + $0x58] sm:$0xff]
        %v863 = vld [vmem:[%s6 + $0x60] sm:$0xff]
        %v864 = vld [vmem:[%s6 + $0x68] sm:$0xff]
        %v865 = vld [vmem:[%s6 + $0x70] sm:$0xff]
        %v866 = vld [vmem:[%s6 + $0x78] sm:$0xff]
        %v867 = vld [vmem:[%s6 + $0x80] sm:$0xff]
        %v868 = vld [vmem:[%s6 + $0x88] sm:$0x3f]
        %870 = vset.pattern.permute.xlu0 0
        %871 = vperm.xlu0 %870, %v851
        %v872 = vpop.permute.xlu0 %871
        %875 = vset.pattern.permute.xlu0 0
        %876 = vperm.xlu0 %875, %v852
        %v877 = vpop.permute.xlu0 %876
        %880 = vset.pattern.permute.xlu0 0
        %881 = vperm.xlu0 %880, %v853
        %v882 = vpop.permute.xlu0 %881
        %885 = vset.pattern.permute.xlu0 0
        %886 = vperm.xlu0 %885, %v854
        %v887 = vpop.permute.xlu0 %886
        %890 = vset.pattern.permute.xlu0 0
        %891 = vperm.xlu0 %890, %v855
        %v892 = vpop.permute.xlu0 %891
        %895 = vset.pattern.permute.xlu0 0
        %896 = vperm.xlu0 %895, %v856
        %v897 = vpop.permute.xlu0 %896
        %900 = vset.pattern.permute.xlu0 0
        %901 = vperm.xlu0 %900, %v857
        %v902 = vpop.permute.xlu0 %901
        %905 = vset.pattern.permute.xlu0 0
        %906 = vperm.xlu0 %905, %v858
        %v907 = vpop.permute.xlu0 %906
        %910 = vset.pattern.permute.xlu0 0
        %911 = vperm.xlu0 %910, %v859
        %v912 = vpop.permute.xlu0 %911
        %915 = vset.pattern.permute.xlu0 0
        %916 = vperm.xlu0 %915, %v860
        %v917 = vpop.permute.xlu0 %916
        %920 = vset.pattern.permute.xlu0 0
        %921 = vperm.xlu0 %920, %v861
        %v922 = vpop.permute.xlu0 %921
        %925 = vset.pattern.permute.xlu0 0
        %926 = vperm.xlu0 %925, %v862
        %v927 = vpop.permute.xlu0 %926
        %930 = vset.pattern.permute.xlu0 0
        %931 = vperm.xlu0 %930, %v863
        %v932 = vpop.permute.xlu0 %931
        %935 = vset.pattern.permute.xlu0 0
        %936 = vperm.xlu0 %935, %v864
        %v937 = vpop.permute.xlu0 %936
        %940 = vset.pattern.permute.xlu0 0
        %941 = vperm.xlu0 %940, %v865
        %v942 = vpop.permute.xlu0 %941
        %945 = vset.pattern.permute.xlu0 0
        %946 = vperm.xlu0 %945, %v866
        %v947 = vpop.permute.xlu0 %946
        %950 = vset.pattern.permute.xlu0 0
        %951 = vperm.xlu0 %950, %v867
        %v952 = vpop.permute.xlu0 %951
        %955 = vset.pattern.permute.xlu0 0
        %956 = vperm.xlu0 %955, %v868
        %v957 = vpop.permute.xlu0 %956
        %v959 = vmul.f32 %v833, %v872
        %v960 = vmul.f32 %v834, %v877
        %v961 = vmul.f32 %v835, %v882
        %v962 = vmul.f32 %v836, %v887
        %v963 = vmul.f32 %v837, %v892
        %v964 = vmul.f32 %v838, %v897
        %v965 = vmul.f32 %v839, %v902
        %v966 = vmul.f32 %v840, %v907
        %v967 = vmul.f32 %v841, %v912
        %v968 = vmul.f32 %v842, %v917
        %v969 = vmul.f32 %v843, %v922
        %v970 = vmul.f32 %v844, %v927
        %v971 = vmul.f32 %v845, %v932
        %v972 = vmul.f32 %v846, %v937
        %v973 = vmul.f32 %v847, %v942
        %v974 = vmul.f32 %v848, %v947
        %v975 = vmul.f32 %v849, %v952
        %v976 = vmul.f32 %v850, %v957
        %vm995 = vcmask 1040384
        %v996 = vrot.slane %v959, 7
        %v997 = vrot.slane %v960, 7
        %v998 = vsel %vm995, %v996, %v997
        %v999 = vrot.slane %v961, 7
        %v1000 = vsel %vm995, %v997, %v999
        %v1001 = vrot.slane %v962, 7
        %v1002 = vsel %vm995, %v999, %v1001
        %v1003 = vrot.slane %v963, 7
        %v1004 = vsel %vm995, %v1001, %v1003
        %v1005 = vrot.slane %v964, 7
        %v1006 = vsel %vm995, %v1003, %v1005
        %v1007 = vrot.slane %v965, 7
        %v1008 = vsel %vm995, %v1005, %v1007
        %v1009 = vrot.slane %v966, 7
        %v1010 = vsel %vm995, %v1007, %v1009
        %v1011 = vrot.slane %v967, 7
        %v1012 = vsel %vm995, %v1009, %v1011
        %v1013 = vrot.slane %v968, 7
        %v1014 = vsel %vm995, %v1011, %v1013
        %v1015 = vrot.slane %v969, 7
        %v1016 = vsel %vm995, %v1013, %v1015
        %v1017 = vrot.slane %v970, 7
        %v1018 = vsel %vm995, %v1015, %v1017
        %v1019 = vrot.slane %v971, 7
        %v1020 = vsel %vm995, %v1017, %v1019
        %v1021 = vrot.slane %v972, 7
        %v1022 = vsel %vm995, %v1019, %v1021
        %v1023 = vrot.slane %v973, 7
        %v1024 = vsel %vm995, %v1021, %v1023
        %v1025 = vrot.slane %v974, 7
        %v1026 = vsel %vm995, %v1023, %v1025
        %v1027 = vrot.slane %v975, 7
        %v1028 = vsel %vm995, %v1025, %v1027
        %v1029 = vrot.slane %v976, 7
        %v1030 = vsel %vm995, %v1027, %v1029
        %v1049 = vsel %vm995, 0.0, %v996
        %vm1050 = vcmask 1046528
        %v1051 = vrot.slane %v959, 1
        %v1052 = vrot.slane %v960, 1
        %v1053 = vsel %vm1050, %v1051, %v1052
        %v1054 = vrot.slane %v961, 1
        %v1055 = vsel %vm1050, %v1052, %v1054
        %v1056 = vrot.slane %v962, 1
        %v1057 = vsel %vm1050, %v1054, %v1056
        %v1058 = vrot.slane %v963, 1
        %v1059 = vsel %vm1050, %v1056, %v1058
        %v1060 = vrot.slane %v964, 1
        %v1061 = vsel %vm1050, %v1058, %v1060
        %v1062 = vrot.slane %v965, 1
        %v1063 = vsel %vm1050, %v1060, %v1062
        %v1064 = vrot.slane %v966, 1
        %v1065 = vsel %vm1050, %v1062, %v1064
        %v1066 = vrot.slane %v967, 1
        %v1067 = vsel %vm1050, %v1064, %v1066
        %v1068 = vrot.slane %v968, 1
        %v1069 = vsel %vm1050, %v1066, %v1068
        %v1070 = vrot.slane %v969, 1
        %v1071 = vsel %vm1050, %v1068, %v1070
        %v1072 = vrot.slane %v970, 1
        %v1073 = vsel %vm1050, %v1070, %v1072
        %v1074 = vrot.slane %v971, 1
        %v1075 = vsel %vm1050, %v1072, %v1074
        %v1076 = vrot.slane %v972, 1
        %v1077 = vsel %vm1050, %v1074, %v1076
        %v1078 = vrot.slane %v973, 1
        %v1079 = vsel %vm1050, %v1076, %v1078
        %v1080 = vrot.slane %v974, 1
        %v1081 = vsel %vm1050, %v1078, %v1080
        %v1082 = vrot.slane %v975, 1
        %v1083 = vsel %vm1050, %v1080, %v1082
        %v1084 = vrot.slane %v976, 1
        %v1085 = vsel %vm1050, %v1082, %v1084
        %vm1104 = vcmask 1044480
        %v1105 = vsel %vm1104, %v1084, 0.0
        %v1106 = vpack.c.bf16 %v998, %v1049
        %v1107 = vpack.c.bf16 %v1002, %v1000
        %v1108 = vpack.c.bf16 %v1006, %v1004
        %v1109 = vpack.c.bf16 %v1010, %v1008
        %v1110 = vpack.c.bf16 %v1014, %v1012
        %v1111 = vpack.c.bf16 %v1018, %v1016
        %v1112 = vpack.c.bf16 %v1022, %v1020
        %v1113 = vpack.c.bf16 %v1026, %v1024
        %v1114 = vpack.c.bf16 %v1030, %v1028
        %v1115 = vpack.c.bf16 %v960, %v959
        %v1116 = vpack.c.bf16 %v962, %v961
        %v1117 = vpack.c.bf16 %v964, %v963
        %v1118 = vpack.c.bf16 %v966, %v965
        %v1119 = vpack.c.bf16 %v968, %v967
        %v1120 = vpack.c.bf16 %v970, %v969
        %v1121 = vpack.c.bf16 %v972, %v971
        %v1122 = vpack.c.bf16 %v974, %v973
        %v1123 = vpack.c.bf16 %v976, %v975
        %v1124 = vpack.c.bf16 %v1055, %v1053
        %v1125 = vpack.c.bf16 %v1059, %v1057
        %v1126 = vpack.c.bf16 %v1063, %v1061
        %v1127 = vpack.c.bf16 %v1067, %v1065
        %v1128 = vpack.c.bf16 %v1071, %v1069
        %v1129 = vpack.c.bf16 %v1075, %v1073
        %v1130 = vpack.c.bf16 %v1079, %v1077
        %v1131 = vpack.c.bf16 %v1083, %v1081
        %v1132 = vpack.c.bf16 %v1105, %v1085
        %v1133 = vld [vmem:[%s2] sm:$0xf]
        %v1134 = vld [vmem:[%s2 + $0x4] sm:$0xf]
        %v1135 = vld [vmem:[%s2 + $0x8] sm:$0xf]
        %v1136 = vld [vmem:[%s2 + $0xc] sm:$0xf]
        %v1137 = vld [vmem:[%s2 + $0x10] sm:$0xf]
        %v1138 = vld [vmem:[%s2 + $0x14] sm:$0xf]
        %v1139 = vld [vmem:[%s2 + $0x18] sm:$0xf]
        %v1140 = vld [vmem:[%s2 + $0x1c] sm:$0xf]
        %v1141 = vld [vmem:[%s2 + $0x20] sm:$0xf]
        %v1142 = vld [vmem:[%s2 + $0x24] sm:$0xf]
        %v1143 = vld [vmem:[%s2 + $0x28] sm:$0xf]
        %v1144 = vld [vmem:[%s2 + $0x2c] sm:$0xf]
        %v1145 = vld [vmem:[%s2 + $0x30] sm:$0xf]
        %v1146 = vld [vmem:[%s2 + $0x34] sm:$0xf]
        %v1147 = vld [vmem:[%s2 + $0x38] sm:$0xf]
        %v1148 = vld [vmem:[%s2 + $0x3c] sm:$0xf]
        %v1149 = vld [vmem:[%s2 + $0x40] sm:$0xf]
        %v1150 = vld [vmem:[%s2 + $0x44] sm:$0xf]
        %v1151 = vld [vmem:[%s2 + $0x48] sm:$0xf]
        %v1152 = vld [vmem:[%s2 + $0x4c] sm:$0xf]
        %v1153 = vld [vmem:[%s2 + $0x50] sm:$0xf]
        %v1154 = vld [vmem:[%s2 + $0x54] sm:$0xf]
        %v1155 = vld [vmem:[%s2 + $0x58] sm:$0xf]
        %v1156 = vld [vmem:[%s2 + $0x5c] sm:$0xf]
        %v1157 = vld [vmem:[%s2 + $0x60] sm:$0xf]
        %v1158 = vld [vmem:[%s2 + $0x64] sm:$0xf]
        %v1159 = vld [vmem:[%s2 + $0x68] sm:$0xf]
        %v1160 = vld [vmem:[%s2 + $0x6c] sm:$0xf]
        %v1161 = vld [vmem:[%s2 + $0x70] sm:$0xf]
        %v1162 = vld [vmem:[%s2 + $0x74] sm:$0xf]
        %v1163 = vld [vmem:[%s2 + $0x78] sm:$0xf]
        %v1164 = vld [vmem:[%s2 + $0x7c] sm:$0xf]
        %v1165 = vld [vmem:[%s2 + $0x80] sm:$0xf]
        %v1166 = vld [vmem:[%s2 + $0x84] sm:$0xf]
        %v1167 = vld [vmem:[%s2 + $0x88] sm:$0xf]
        %v1168 = vld [vmem:[%s2 + $0x8c] sm:$0xf]
        %v1169 = vld [vmem:[%s2 + $0x90] sm:$0xf]
        %v1170 = vld [vmem:[%s2 + $0x94] sm:$0xf]
        %v1171 = vld [vmem:[%s2 + $0x98] sm:$0xf]
        %v1172 = vld [vmem:[%s2 + $0x9c] sm:$0xf]
        %v1173 = vld [vmem:[%s2 + $0xa0] sm:$0xf]
        %v1174 = vld [vmem:[%s2 + $0xa4] sm:$0xf]
        %v1175 = vld [vmem:[%s2 + $0xa8] sm:$0xf]
        %v1176 = vld [vmem:[%s2 + $0xac] sm:$0xf]
        %v1177 = vld [vmem:[%s2 + $0xb0] sm:$0xf]
        %v1178 = vld [vmem:[%s2 + $0xb4] sm:$0xf]
        %v1179 = vld [vmem:[%s2 + $0xb8] sm:$0xf]
        %v1180 = vld [vmem:[%s2 + $0xbc] sm:$0xf]
        %v1181 = vld [vmem:[%s4] sm:$0x1]
        %v1183 = vlaneseq
        %v1184 = vshrl.u32 %v1183, 7
        %v1185 = vsub.s32 0, %v1184
        %v1186 = vrot.slane %v1181, %v1185
        %v1236 = vunpack.c.l.b16 %v1133
        %v1237 = vunpack.c.l.b16 %v1134
        %v1238 = vunpack.c.l.b16 %v1135
        %v1239 = vunpack.c.l.b16 %v1136
        %v1240 = vunpack.c.l.b16 %v1137
        %v1241 = vunpack.c.l.b16 %v1138
        %v1242 = vunpack.c.l.b16 %v1139
        %v1243 = vunpack.c.l.b16 %v1140
        %v1244 = vunpack.c.l.b16 %v1141
        %v1245 = vunpack.c.l.b16 %v1142
        %v1246 = vunpack.c.l.b16 %v1143
        %v1247 = vunpack.c.l.b16 %v1144
        %v1248 = vunpack.c.l.b16 %v1145
        %v1249 = vunpack.c.l.b16 %v1146
        %v1250 = vunpack.c.l.b16 %v1147
        %v1251 = vunpack.c.l.b16 %v1148
        %v1252 = vunpack.c.l.b16 %v1149
        %v1253 = vunpack.c.l.b16 %v1150
        %v1254 = vunpack.c.l.b16 %v1151
        %v1255 = vunpack.c.l.b16 %v1152
        %v1256 = vunpack.c.l.b16 %v1153
        %v1257 = vunpack.c.l.b16 %v1154
        %v1258 = vunpack.c.l.b16 %v1155
        %v1259 = vunpack.c.l.b16 %v1156
        %v1260 = vunpack.c.l.b16 %v1157
        %v1261 = vunpack.c.l.b16 %v1158
        %v1262 = vunpack.c.l.b16 %v1159
        %v1263 = vunpack.c.l.b16 %v1160
        %v1264 = vunpack.c.l.b16 %v1161
        %v1265 = vunpack.c.l.b16 %v1162
        %v1266 = vunpack.c.l.b16 %v1163
        %v1267 = vunpack.c.l.b16 %v1164
        %v1268 = vunpack.c.l.b16 %v1165
        %v1269 = vunpack.c.l.b16 %v1166
        %v1270 = vunpack.c.l.b16 %v1167
        %v1271 = vunpack.c.l.b16 %v1168
        %v1272 = vunpack.c.l.b16 %v1169
        %v1273 = vunpack.c.l.b16 %v1170
        %v1274 = vunpack.c.l.b16 %v1171
        %v1275 = vunpack.c.l.b16 %v1172
        %v1276 = vunpack.c.l.b16 %v1173
        %v1277 = vunpack.c.l.b16 %v1174
        %v1278 = vunpack.c.l.b16 %v1175
        %v1279 = vunpack.c.l.b16 %v1176
        %v1280 = vunpack.c.l.b16 %v1177
        %v1281 = vunpack.c.l.b16 %v1178
        %v1282 = vunpack.c.l.b16 %v1179
        %v1283 = vunpack.c.l.b16 %v1180
        %v1284 = vpack.c.b16 %v1237, %v1236
        %v1285 = vpack.c.b16 %v1239, %v1238
        %v1286 = vpack.c.b16 %v1241, %v1240
        %v1287 = vpack.c.b16 %v1243, %v1242
        %v1288 = vpack.c.b16 %v1245, %v1244
        %v1289 = vpack.c.b16 %v1247, %v1246
        %v1290 = vpack.c.b16 %v1249, %v1248
        %v1291 = vpack.c.b16 %v1251, %v1250
        %v1292 = vpack.c.b16 %v1253, %v1252
        %v1293 = vpack.c.b16 %v1255, %v1254
        %v1294 = vpack.c.b16 %v1257, %v1256
        %v1295 = vpack.c.b16 %v1259, %v1258
        %v1296 = vpack.c.b16 %v1261, %v1260
        %v1297 = vpack.c.b16 %v1263, %v1262
        %v1298 = vpack.c.b16 %v1265, %v1264
        %v1299 = vpack.c.b16 %v1267, %v1266
        %v1300 = vpack.c.b16 %v1269, %v1268
        %v1301 = vpack.c.b16 %v1271, %v1270
        %v1302 = vpack.c.b16 %v1273, %v1272
        %v1303 = vpack.c.b16 %v1275, %v1274
        %v1304 = vpack.c.b16 %v1277, %v1276
        %v1305 = vpack.c.b16 %v1279, %v1278
        %v1306 = vpack.c.b16 %v1281, %v1280
        %v1307 = vpack.c.b16 %v1283, %v1282
        %1332 = vmatprep.subr.bf16.mxu0 0
        %1333 = vmatpush1.bf16.msra.mxu0 %v1284
        %1334 = vmatprep.subr.bf16.mxu0 0
        %1335 = vmatpush1.bf16.msra.mxu0 %v1285
        %1336 = vmatprep.subr.bf16.mxu0 0
        %1337 = vmatpush1.bf16.msra.mxu0 %v1286
        %1338 = vmatprep.subr.bf16.mxu0 0
        %1339 = vmatpush1.bf16.msra.mxu0 %v1287
        %1340 = vmatprep.subr.bf16.mxu0 0
        %1341 = vmatpush1.bf16.msra.mxu0 %v1288
        %1342 = vmatprep.subr.bf16.mxu0 0
        %1343 = vmatpush1.bf16.msra.mxu0 %v1289
        %1344 = vmatprep.subr.bf16.mxu0 0
        %1345 = vmatpush1.bf16.msra.mxu0 %v1290
        %1346 = vmatprep.subr.bf16.mxu0 0
        %1347 = vmatpush1.bf16.msra.mxu0 %v1291
        %1348 = vmatprep.subr.bf16.mxu0 0
        %1349 = vmatpush1.bf16.msra.mxu0 %v1292
        %1350 = vmatprep.subr.bf16.mxu0 0
        %1351 = vmatpush1.bf16.msra.mxu0 %v1293
        %1352 = vmatprep.subr.bf16.mxu0 0
        %1353 = vmatpush1.bf16.msra.mxu0 %v1294
        %1354 = vmatprep.subr.bf16.mxu0 0
        %1355 = vmatpush1.bf16.msra.mxu0 %v1295
        %1356 = vmatprep.subr.bf16.mxu0 0
        %1357 = vmatpush1.bf16.msra.mxu0 %v1296
        %1358 = vmatprep.subr.bf16.mxu0 0
        %1359 = vmatpush1.bf16.msra.mxu0 %v1297
        %1360 = vmatprep.subr.bf16.mxu0 0
        %1361 = vmatpush1.bf16.msra.mxu0 %v1298
        %1362 = vmatprep.subr.bf16.mxu0 0
        %1363 = vmatpush1.bf16.msra.mxu0 %v1299
        %1364 = vmatprep.mubr.bf16.mxu0 %v1115
        %1365 = vmatmul.mubr.bf16.gmra.mrb[0].mxu0 %v1106
        %v1366 = vpop.f32.mrb[0].mxu0
        %v1367 = vadd.f32 %v1186, %v1366
        %v1368 = vpop.f32.mrb[0].mxu0
        %v1369 = vpop.f32.mrb[0].mxu0
        %v1370 = vadd.f32 %v1186, %v1369
        %v1371 = vpop.f32.mrb[0].mxu0
        %1372 = vmatprep.mubr.bf16.mxu0 %v1116
        %1373 = vmatmul.mubr.bf16.gmra.mrb[0].mxu0 %v1107
        %v1374 = vpop.f32.mrb[0].mxu0
        %v1375 = vadd.f32 %v1186, %v1374
        %v1376 = vpop.f32.mrb[0].mxu0
        %v1377 = vpop.f32.mrb[0].mxu0
        %v1378 = vadd.f32 %v1186, %v1377
        %v1379 = vpop.f32.mrb[0].mxu0
        %1380 = vmatprep.mubr.bf16.mxu0 %v1117
        %1381 = vmatmul.mubr.bf16.gmra.mrb[0].mxu0 %v1108
        %v1382 = vpop.f32.mrb[0].mxu0
        %v1383 = vadd.f32 %v1186, %v1382
        %v1384 = vpop.f32.mrb[0].mxu0
        %v1385 = vpop.f32.mrb[0].mxu0
        %v1386 = vadd.f32 %v1186, %v1385
        %v1387 = vpop.f32.mrb[0].mxu0
        %1388 = vmatprep.mubr.bf16.mxu0 %v1118
        %1389 = vmatmul.mubr.bf16.gmra.mrb[0].mxu0 %v1109
        %v1390 = vpop.f32.mrb[0].mxu0
        %v1391 = vadd.f32 %v1186, %v1390
        %v1392 = vpop.f32.mrb[0].mxu0
        %v1393 = vpop.f32.mrb[0].mxu0
        %v1394 = vadd.f32 %v1186, %v1393
        %v1395 = vpop.f32.mrb[0].mxu0
        %1396 = vmatprep.mubr.bf16.mxu0 %v1119
        %1397 = vmatmul.mubr.bf16.gmra.mrb[0].mxu0 %v1110
        %v1398 = vpop.f32.mrb[0].mxu0
        %v1399 = vadd.f32 %v1186, %v1398
        %v1400 = vpop.f32.mrb[0].mxu0
        %v1401 = vpop.f32.mrb[0].mxu0
        %v1402 = vadd.f32 %v1186, %v1401
        %v1403 = vpop.f32.mrb[0].mxu0
        %1404 = vmatprep.mubr.bf16.mxu0 %v1120
        %1405 = vmatmul.mubr.bf16.gmra.mrb[0].mxu0 %v1111
        %v1406 = vpop.f32.mrb[0].mxu0
        %v1407 = vadd.f32 %v1186, %v1406
        %v1408 = vpop.f32.mrb[0].mxu0
        %v1409 = vpop.f32.mrb[0].mxu0
        %v1410 = vadd.f32 %v1186, %v1409
        %v1411 = vpop.f32.mrb[0].mxu0
        %1412 = vmatprep.mubr.bf16.mxu0 %v1121
        %1413 = vmatmul.mubr.bf16.gmra.mrb[0].mxu0 %v1112
        %v1414 = vpop.f32.mrb[0].mxu0
        %v1415 = vadd.f32 %v1186, %v1414
        %v1416 = vpop.f32.mrb[0].mxu0
        %v1417 = vpop.f32.mrb[0].mxu0
        %v1418 = vadd.f32 %v1186, %v1417
        %v1419 = vpop.f32.mrb[0].mxu0
        %1420 = vmatprep.mubr.bf16.mxu0 %v1122
        %1421 = vmatmul.mubr.bf16.gmra.mrb[0].mxu0 %v1113
        %v1422 = vpop.f32.mrb[0].mxu0
        %v1423 = vadd.f32 %v1186, %v1422
        %v1424 = vpop.f32.mrb[0].mxu0
        %v1425 = vpop.f32.mrb[0].mxu0
        %v1426 = vadd.f32 %v1186, %v1425
        %v1427 = vpop.f32.mrb[0].mxu0
        %1428 = vmatprep.mubr.bf16.mxu0 %v1123
        %1429 = vmatmul.mubr.bf16.gmra.mrb[0].mxu0 %v1114
        %v1430 = vpop.f32.mrb[0].mxu0
        %v1431 = vadd.f32 %v1186, %v1430
        %v1432 = vpop.f32.mrb[0].mxu0
        %v1433 = vpop.f32.mrb[0].mxu0
        %v1434 = vadd.f32 %v1186, %v1433
        %v1435 = vpop.f32.mrb[0].mxu0
        %1436 = vdwg.mxu0
        %1437 = vmatprep.subr.bf16.mxu0 0
        %1438 = vmatpush1.bf16.msra.mxu0 %v1300
        %1439 = vmatprep.subr.bf16.mxu0 0
        %1440 = vmatpush1.bf16.msra.mxu0 %v1301
        %1441 = vmatprep.subr.bf16.mxu0 0
        %1442 = vmatpush1.bf16.msra.mxu0 %v1302
        %1443 = vmatprep.subr.bf16.mxu0 0
        %1444 = vmatpush1.bf16.msra.mxu0 %v1303
        %1445 = vmatprep.subr.bf16.mxu0 0
        %1446 = vmatpush1.bf16.msra.mxu0 %v1304
        %1447 = vmatprep.subr.bf16.mxu0 0
        %1448 = vmatpush1.bf16.msra.mxu0 %v1305
        %1449 = vmatprep.subr.bf16.mxu0 0
        %1450 = vmatpush1.bf16.msra.mxu0 %v1306
        %1451 = vmatprep.subr.bf16.mxu0 0
        %1452 = vmatpush1.bf16.msra.mxu0 %v1307
        %1453 = vmatprep.subr.bf16.mxu0 0
        %1454 = vmatpush1.bf16.msra.mxu0 0
        %1455 = vmatprep.subr.bf16.mxu0 0
        %1456 = vmatpush1.bf16.msra.mxu0 0
        %1457 = vmatprep.subr.bf16.mxu0 0
        %1458 = vmatpush1.bf16.msra.mxu0 0
        %1459 = vmatprep.subr.bf16.mxu0 0
        %1460 = vmatpush1.bf16.msra.mxu0 0
        %1461 = vmatprep.subr.bf16.mxu0 0
        %1462 = vmatpush1.bf16.msra.mxu0 0
        %1463 = vmatprep.subr.bf16.mxu0 0
        %1464 = vmatpush1.bf16.msra.mxu0 0
        %1465 = vmatprep.subr.bf16.mxu0 0
        %1466 = vmatpush1.bf16.msra.mxu0 0
        %1467 = vmatprep.subr.bf16.mxu0 0
        %1468 = vmatpush1.bf16.msra.mxu0 0
        %1469 = vmatprep.mubr.bf16.mxu0 0
        %1470 = vmatmul.mubr.bf16.gmra.mrb[0].mxu0 %v1124
        %v1471 = vpop.f32.mrb[0].mxu0
        %v1472 = vadd.f32 %v1367, %v1471
        %v1473 = vpop.f32.mrb[0].mxu0
        %v1474 = vpop.f32.mrb[0].mxu0
        %v1475 = vadd.f32 %v1370, %v1474
        %v1476 = vpop.f32.mrb[0].mxu0
        %1477 = vmatprep.mubr.bf16.mxu0 0
        %1478 = vmatmul.mubr.bf16.gmra.mrb[0].mxu0 %v1125
        %v1479 = vpop.f32.mrb[0].mxu0
        %v1480 = vadd.f32 %v1375, %v1479
        %v1481 = vpop.f32.mrb[0].mxu0
        %v1482 = vpop.f32.mrb[0].mxu0
        %v1483 = vadd.f32 %v1378, %v1482
        %v1484 = vpop.f32.mrb[0].mxu0
        %1485 = vmatprep.mubr.bf16.mxu0 0
        %1486 = vmatmul.mubr.bf16.gmra.mrb[0].mxu0 %v1126
        %v1487 = vpop.f32.mrb[0].mxu0
        %v1488 = vadd.f32 %v1383, %v1487
        %v1489 = vpop.f32.mrb[0].mxu0
        %v1490 = vpop.f32.mrb[0].mxu0
        %v1491 = vadd.f32 %v1386, %v1490
        %v1492 = vpop.f32.mrb[0].mxu0
        %1493 = vmatprep.mubr.bf16.mxu0 0
        %1494 = vmatmul.mubr.bf16.gmra.mrb[0].mxu0 %v1127
        %v1495 = vpop.f32.mrb[0].mxu0
        %v1496 = vadd.f32 %v1391, %v1495
        %v1497 = vpop.f32.mrb[0].mxu0
        %v1498 = vpop.f32.mrb[0].mxu0
        %v1499 = vadd.f32 %v1394, %v1498
        %v1500 = vpop.f32.mrb[0].mxu0
        %1501 = vmatprep.mubr.bf16.mxu0 0
        %1502 = vmatmul.mubr.bf16.gmra.mrb[0].mxu0 %v1128
        %v1503 = vpop.f32.mrb[0].mxu0
        %v1504 = vadd.f32 %v1399, %v1503
        %v1505 = vpop.f32.mrb[0].mxu0
        %v1506 = vpop.f32.mrb[0].mxu0
        %v1507 = vadd.f32 %v1402, %v1506
        %v1508 = vpop.f32.mrb[0].mxu0
        %1509 = vmatprep.mubr.bf16.mxu0 0
        %1510 = vmatmul.mubr.bf16.gmra.mrb[0].mxu0 %v1129
        %v1511 = vpop.f32.mrb[0].mxu0
        %v1512 = vadd.f32 %v1407, %v1511
        %v1513 = vpop.f32.mrb[0].mxu0
        %v1514 = vpop.f32.mrb[0].mxu0
        %v1515 = vadd.f32 %v1410, %v1514
        %v1516 = vpop.f32.mrb[0].mxu0
        %1517 = vmatprep.mubr.bf16.mxu0 0
        %1518 = vmatmul.mubr.bf16.gmra.mrb[0].mxu0 %v1130
        %v1519 = vpop.f32.mrb[0].mxu0
        %v1520 = vadd.f32 %v1415, %v1519
        %v1521 = vpop.f32.mrb[0].mxu0
        %v1522 = vpop.f32.mrb[0].mxu0
        %v1523 = vadd.f32 %v1418, %v1522
        %v1524 = vpop.f32.mrb[0].mxu0
        %1525 = vmatprep.mubr.bf16.mxu0 0
        %1526 = vmatmul.mubr.bf16.gmra.mrb[0].mxu0 %v1131
        %v1527 = vpop.f32.mrb[0].mxu0
        %v1528 = vadd.f32 %v1423, %v1527
        %v1529 = vpop.f32.mrb[0].mxu0
        %v1530 = vpop.f32.mrb[0].mxu0
        %v1531 = vadd.f32 %v1426, %v1530
        %v1532 = vpop.f32.mrb[0].mxu0
        %1533 = vmatprep.mubr.bf16.mxu0 0
        %1534 = vmatmul.mubr.bf16.gmra.mrb[0].mxu0 %v1132
        %v1535 = vpop.f32.mrb[0].mxu0
        %v1536 = vadd.f32 %v1431, %v1535
        %v1537 = vpop.f32.mrb[0].mxu0
        %v1538 = vpop.f32.mrb[0].mxu0
        %v1539 = vadd.f32 %v1434, %v1538
        %v1540 = vpop.f32.mrb[0].mxu0
        %1541 = vdwg.mxu0
        %v1542 = vld [vmem:[#allocation2] sm:$0xff]
        %v1543 = vld [vmem:[#allocation2 + $0x8] sm:$0xff]
        %v1544 = vld [vmem:[#allocation2 + $0x10] sm:$0xff]
        %v1545 = vld [vmem:[#allocation2 + $0x18] sm:$0xff]
        %v1546 = vld [vmem:[#allocation2 + $0x20] sm:$0xff]
        %v1547 = vld [vmem:[#allocation2 + $0x28] sm:$0xff]
        %v1548 = vld [vmem:[#allocation2 + $0x30] sm:$0xff]
        %v1549 = vld [vmem:[#allocation2 + $0x38] sm:$0xff]
        %v1550 = vld [vmem:[#allocation2 + $0x40] sm:$0xff]
        %v1551 = vld [vmem:[#allocation2 + $0x48] sm:$0xff]
        %v1552 = vld [vmem:[#allocation2 + $0x50] sm:$0xff]
        %v1553 = vld [vmem:[#allocation2 + $0x58] sm:$0xff]
        %v1554 = vld [vmem:[#allocation2 + $0x60] sm:$0xff]
        %v1555 = vld [vmem:[#allocation2 + $0x68] sm:$0xff]
        %v1556 = vld [vmem:[#allocation2 + $0x70] sm:$0xff]
        %v1557 = vld [vmem:[#allocation2 + $0x78] sm:$0xff]
        %v1558 = vld [vmem:[#allocation2 + $0x80] sm:$0xff]
        %v1559 = vld [vmem:[#allocation2 + $0x88] sm:$0x3f]
        %v1560 = vadd.f32 %v1472, %v1542
        %v1561 = vadd.f32 %v1475, %v1543
        %v1562 = vadd.f32 %v1480, %v1544
        %v1563 = vadd.f32 %v1483, %v1545
        %v1564 = vadd.f32 %v1488, %v1546
        %v1565 = vadd.f32 %v1491, %v1547
        %v1566 = vadd.f32 %v1496, %v1548
        %v1567 = vadd.f32 %v1499, %v1549
        %v1568 = vadd.f32 %v1504, %v1550
        %v1569 = vadd.f32 %v1507, %v1551
        %v1570 = vadd.f32 %v1512, %v1552
        %v1571 = vadd.f32 %v1515, %v1553
        %v1572 = vadd.f32 %v1520, %v1554
        %v1573 = vadd.f32 %v1523, %v1555
        %v1574 = vadd.f32 %v1528, %v1556
        %v1575 = vadd.f32 %v1531, %v1557
        %v1576 = vadd.f32 %v1536, %v1558
        %v1577 = vadd.f32 %v1539, %v1559
        %v1578 = vmax.f32 %v1560, 0.0
        %v1579 = vmax.f32 %v1561, 0.0
        %v1580 = vmax.f32 %v1562, 0.0
        %v1581 = vmax.f32 %v1563, 0.0
        %v1582 = vmax.f32 %v1564, 0.0
        %v1583 = vmax.f32 %v1565, 0.0
        %v1584 = vmax.f32 %v1566, 0.0
        %v1585 = vmax.f32 %v1567, 0.0
        %v1586 = vmax.f32 %v1568, 0.0
        %v1587 = vmax.f32 %v1569, 0.0
        %v1588 = vmax.f32 %v1570, 0.0
        %v1589 = vmax.f32 %v1571, 0.0
        %v1590 = vmax.f32 %v1572, 0.0
        %v1591 = vmax.f32 %v1573, 0.0
        %v1592 = vmax.f32 %v1574, 0.0
        %v1593 = vmax.f32 %v1575, 0.0
        %v1594 = vmax.f32 %v1576, 0.0
        %v1595 = vmax.f32 %v1577, 0.0
        %1596 = vst [vmem:[%s272] sm:$0xff] %v1578
        %1597 = vst [vmem:[%s272 + $0x8] sm:$0xff] %v1579
        %1598 = vst [vmem:[%s272 + $0x10] sm:$0xff] %v1580
        %1599 = vst [vmem:[%s272 + $0x18] sm:$0xff] %v1581
        %1600 = vst [vmem:[%s272 + $0x20] sm:$0xff] %v1582
        %1601 = vst [vmem:[%s272 + $0x28] sm:$0xff] %v1583
        %1602 = vst [vmem:[%s272 + $0x30] sm:$0xff] %v1584
        %1603 = vst [vmem:[%s272 + $0x38] sm:$0xff] %v1585
        %1604 = vst [vmem:[%s272 + $0x40] sm:$0xff] %v1586
        %1605 = vst [vmem:[%s272 + $0x48] sm:$0xff] %v1587
        %1606 = vst [vmem:[%s272 + $0x50] sm:$0xff] %v1588
        %1607 = vst [vmem:[%s272 + $0x58] sm:$0xff] %v1589
        %1608 = vst [vmem:[%s272 + $0x60] sm:$0xff] %v1590
        %1609 = vst [vmem:[%s272 + $0x68] sm:$0xff] %v1591
        %1610 = vst [vmem:[%s272 + $0x70] sm:$0xff] %v1592
        %1611 = vst [vmem:[%s272 + $0x78] sm:$0xff] %v1593
        %1612 = vst [vmem:[%s272 + $0x80] sm:$0xff] %v1594
        %1613 = vst [vmem:[%s272 + $0x88] sm:$0x3f] %v1595
        %1614 = vst [vmem:[%s272 + $0x8e] sm:$0x3] 0.0
        %s1615 = sand.u32 %s181, 1
        %s1616 = scalar_lea.sflag [#allocation4], %s1615
        %s1617 = sand.u32 %s181, 1
        %s1618 = smul.addr %s1617, 144
        %s1619 = scalar_lea.vmem [#allocation3], %s1618
        // Predicated region
        $region49: #{tpu_custom_call.1} parent=47 // pred_check
          %p1620 = pneg %p191
        $region50: #{tpu_custom_call.1} parent=47 // pred_check_branch
          %1622 = sbr.rel (%p1620) target = $region52
        $region51: #{tpu_custom_call.1} parent=47 // pred_region
          %s1623 = smul.u32 18, %s21
          %s1625 = ssub.s32 2304, 2304
          %1626 = vsyncadd %s1616, %s1625
          %s1627 = smul.addr %s1623, 128
          %s1628 = scalar_lea.hbm %s7, %s1627
          %s1629 = sshll.u32 %s1619, 4
          %s1630 = int_to_ptr.vmem [resolvable:$true] %s1629
          %1635 = dma.vmem_to_hbm [thread:$0]  %s1630, 2304, %s1628, %s1616, 128, 128, 8
        $region52: #{tpu_custom_call.1} parent=47 // pred_fallthru
          _
      $region48: #{tpu_custom_call.1} parent=5 // pred_fallthru
        _
      %p1636 = scmp.le.s32.totalorder 2, %s16
      // Predicated region
      $region53: #{tpu_custom_call.1} parent=5 // pred_check
        %p1637 = pneg %p1636
      $region54: #{tpu_custom_call.1} parent=5 // pred_check_branch
        %1639 = sbr.rel (%p1637) target = $region56
      $region55: #{tpu_custom_call.1} parent=5 // pred_region
        %s1640 = ssub.s32 %s16, 2
        // Predicated region
        $region57: #{tpu_custom_call.1} parent=55 // pred_check
          %p1641 = pneg %p197
        $region58: #{tpu_custom_call.1} parent=55 // pred_check_branch
          %1643 = sbr.rel (%p1641) target = $region60
        $region59: #{tpu_custom_call.1} parent=55 // pred_region
          %s1644 = sand.u32 %s182, 1
          %s1645 = scalar_lea.sflag [#allocation4], %s1644
          %s1646 = sand.u32 %s182, 1
          %s1647 = smul.addr %s1646, 144
          %s1648 = scalar_lea.vmem [#allocation3], %s1647
          %1649 = dma.done %s1645, 2304
        $region60: #{tpu_custom_call.1} parent=55 // pred_fallthru
          _
      $region56: #{tpu_custom_call.1} parent=5 // pred_fallthru
        _
    $region6: #{tpu_custom_call.1} parent=1 // loop_footer
      %s20 = sadd.s32 1, %s16
    $region7: #{tpu_custom_call.1} parent=1 // loop_footer_branch
      %15 = sbr.rel target = $region3
    $region8: #{tpu_custom_call.1} parent=1 // loop_exit
      _
    %1650 = vsyncpa [#allocation4], 1
    %s1651 = scalar_lea.sflag [#allocation4], 1
    %1652 = vsyncpa %s1651, 1

</llo_original>
